<compile_context>
chip_gen: v5e
topology: v5e:2x2
jax: 0.10.0
libtpu: 0.0.40
codegen_flags: <defaults>
</compile_context>

<pallas_src>
import math

import jax
import jax.numpy as jnp
from jax.experimental import pallas as pl
from jax.experimental.pallas import tpu as pltpu


# ----------------------------------------------------------------------------
# Fused DecoderLayer kernel: one (batch, query-tile) per grid step.
# ----------------------------------------------------------------------------
def decoder_layer_kernel(x_full_ref, x_q_ref, pad_ref, wq_ref, wkv_ref, wo_ref,
                         w1_ref, w2_ref, g1_ref, b1_ref, g2_ref, b2_ref,
                         out_ref, attn_ref, k_scratch, v_scratch):
    # Block shapes:
    #   x_full (1, L, E)   x_q (1, tq, E)   pad (1, 1, L)  (1.0 == pad token)
    #   wq  (E, H*dk)  [scale folded]   wkv (E, H*(dk+dv))   wo (H*dv, E)
    #   w1  (E, d_ff)  w2 (d_ff, E)     g*/b* (1, E)
    #   out (1, tq, E)  attn (1, H, tq, L)
    #   k_scratch (H, L, dk)  v_scratch (H, L, dv)   [persistent across q tiles]
    L = x_full_ref.shape[1]
    tq = x_q_ref.shape[1]
    H = attn_ref.shape[1]
    dk = k_scratch.shape[2]
    dv = v_scratch.shape[2]
    cdt = wq_ref.dtype                 # MXU compute dtype (bf16 in production)
    qi = pl.program_id(1)

    # ---- K/V projection: ONE fused [L,E] @ [E,H*(dk+dv)] matmul per batch
    # element (first query tile only), cached per-head in VMEM scratch. ----
    @pl.when(qi == 0)
    def _():
        x_all = x_full_ref[0].astype(cdt)                               # [L, E]
        kv = jnp.dot(x_all, wkv_ref[...],
                     preferred_element_type=jnp.float32)                # [L, H*(dk+dv)]
        for h in range(H):                                              # static unroll
            k_scratch[h] = kv[:, h * dk:(h + 1) * dk].astype(k_scratch.dtype)
            v_scratch[h] = kv[:, H * dk + h * dv:
                              H * dk + (h + 1) * dv].astype(v_scratch.dtype)

    # ---- Q projection for this query tile: one wide fused matmul
    # (1/sqrt(dk) already folded into wq on the host). ----
    x_tile = x_q_ref[0]                                                  # [tq, E] f32
    q_flat = jnp.dot(x_tile.astype(cdt), wq_ref[...],
                     preferred_element_type=jnp.float32)                 # [tq, H*dk]

    # ---- causal + pad mask rebuilt in-kernel from the [1, L] pad vector
    # (iota/compare VPU work hidden under the score matmuls). ----
    q0 = qi * tq
    row = jax.lax.broadcasted_iota(jnp.int32, (tq, L), 0) + q0           # query position
    col = jax.lax.broadcasted_iota(jnp.int32, (tq, L), 1)                # key position
    masked = jnp.logical_or(col > row, pad_ref[0] > 0.0)                 # [tq, L]

    # ---- attention, head by head (static unroll). Score matmuls are lane-width
    # L (full MXU tiles); per-head splits are static lane slices of the fused
    # projection outputs. ----
    ctx_heads = []
    for h in range(H):
        q_h = q_flat[:, h * dk:(h + 1) * dk].astype(cdt)                 # [tq, dk]
        s_h = jax.lax.dot_general(q_h, k_scratch[h],
                                  (((1,), (1,)), ((), ())),
                                  preferred_element_type=jnp.float32)    # [tq, L]
        s_h = jnp.where(masked, -1e9, s_h)                               # masked_fill
        m_h = jnp.max(s_h, axis=-1, keepdims=True)
        e_h = jnp.exp(s_h - m_h)
        den = jnp.sum(e_h, axis=-1, keepdims=True)                       # [tq, 1]
        inv = pl.reciprocal(den, approx=True)                            # EUP slot
        inv = inv * (2.0 - den * inv)                                    # Newton -> f32 accurate
        attn_ref[0, h] = (e_h * inv).astype(attn_ref.dtype)              # prob writeback
        # Normalize the context (tq x dv) rather than the probs (tq x L).
        ctx_h = jnp.dot(e_h.astype(cdt), v_scratch[h],
                        preferred_element_type=jnp.float32) * inv        # [tq, dv]
        ctx_heads.append(ctx_h)

    # ---- output projection: single [tq, H*dv] @ [H*dv, E] matmul. ----
    ctx = jnp.concatenate(ctx_heads, axis=-1)                            # [tq, H*dv]
    proj = jnp.dot(ctx.astype(cdt), wo_ref[...],
                   preferred_element_type=jnp.float32)                   # [tq, E]
    mha = proj + x_tile                                                  # residual (f32)

    # ---- LayerNorm 1 (eps=1e-5, biased variance — PyTorch semantics, f32). ----
    mu1 = jnp.mean(mha, axis=-1, keepdims=True)
    var1 = jnp.mean((mha - mu1) ** 2, axis=-1, keepdims=True)
    y = (mha - mu1) * jax.lax.rsqrt(var1 + 1e-5) * g1_ref[0] + b1_ref[0]

    # ---- PoswiseFeedForwardNet (compute-dtype matmuls, f32 accumulation). ----
    h1 = jnp.maximum(jnp.dot(y.astype(cdt), w1_ref[...],
                             preferred_element_type=jnp.float32), 0.0)   # [tq, d_ff]
    h2 = jnp.dot(h1.astype(cdt), w2_ref[...],
                 preferred_element_type=jnp.float32)                     # [tq, E]
    z = h2 + y

    # ---- LayerNorm 2 ----
    mu2 = jnp.mean(z, axis=-1, keepdims=True)
    var2 = jnp.mean((z - mu2) ** 2, axis=-1, keepdims=True)
    out = (z - mu2) * jax.lax.rsqrt(var2 + 1e-5) * g2_ref[0] + b2_ref[0]
    out_ref[0] = out.astype(out_ref.dtype)


# ----------------------------------------------------------------------------
# Wrapper for one DecoderLayer pallas_call.
# ----------------------------------------------------------------------------
def decoder_layer_pallas(x, pad, lp, *, tq, attn_dtype=jnp.float32):
    B, L, E = x.shape
    H, dk, dv = lp['num_heads'], lp['d_k'], lp['d_v']
    d_ff = lp['w1'].shape[1]
    cdt = lp['wq'].dtype
    assert L % tq == 0 and tq % 8 == 0, "query tile must divide L and be 8-aligned"
    n_q = L // tq

    def nbytes(shape, dtype):
        return math.prod(shape) * jnp.dtype(dtype).itemsize

    # Explicit scoped-VMEM budget: double-buffered blocks + persistent K/V
    # scratch, 2x headroom, floored at 32 MiB (safe on v5e/v6e/v7x).
    est = (2 * (nbytes((1, L, E), x.dtype) + nbytes((1, tq, E), x.dtype)
                + nbytes((1, 1, L), pad.dtype)
                + nbytes(lp['wq'].shape, cdt) + nbytes(lp['wkv'].shape, cdt)
                + nbytes(lp['wo'].shape, cdt) + nbytes(lp['w1'].shape, cdt)
                + nbytes(lp['w2'].shape, cdt) + 4 * nbytes((1, E), jnp.float32)
                + nbytes((1, tq, E), x.dtype) + nbytes((1, H, tq, L), attn_dtype))
           + nbytes((H, L, dk), cdt) + nbytes((H, L, dv), cdt))
    vmem_limit = int(min(128 * 1024 * 1024, max(32 * 1024 * 1024, 2 * est)))

    grid_spec = pltpu.PrefetchScalarGridSpec(
        num_scalar_prefetch=0,
        grid=(B, n_q),
        in_specs=[
            pl.BlockSpec((1, L, E), lambda b, q: (b, 0, 0)),        # x (full seq, K/V)
            pl.BlockSpec((1, tq, E), lambda b, q: (b, q, 0)),       # x (query tile)
            pl.BlockSpec((1, 1, L), lambda b, q: (b, 0, 0)),        # pad vector
            pl.BlockSpec((E, H * dk), lambda b, q: (0, 0)),         # Wq (scaled)
            pl.BlockSpec((E, H * (dk + dv)), lambda b, q: (0, 0)),  # Wk|Wv fused
            pl.BlockSpec((H * dv, E), lambda b, q: (0, 0)),         # Wo
            pl.BlockSpec((E, d_ff), lambda b, q: (0, 0)),           # W1
            pl.BlockSpec((d_ff, E), lambda b, q: (0, 0)),           # W2
            pl.BlockSpec((1, E), lambda b, q: (0, 0)),              # ln1 gamma
            pl.BlockSpec((1, E), lambda b, q: (0, 0)),              # ln1 beta
            pl.BlockSpec((1, E), lambda b, q: (0, 0)),              # ln2 gamma
            pl.BlockSpec((1, E), lambda b, q: (0, 0)),              # ln2 beta
        ],
        out_specs=[
            pl.BlockSpec((1, tq, E), lambda b, q: (b, q, 0)),
            pl.BlockSpec((1, H, tq, L), lambda b, q: (b, 0, q, 0)),
        ],
        scratch_shapes=[
            pltpu.VMEM((H, L, dk), cdt),      # K cache (per batch element)
            pltpu.VMEM((H, L, dv), cdt),      # V cache
        ],
    )

    return pl.pallas_call(
        decoder_layer_kernel,
        out_shape=(
            jax.ShapeDtypeStruct((B, L, E), x.dtype),
            jax.ShapeDtypeStruct((B, H, L, L), attn_dtype),
        ),
        grid_spec=grid_spec,
        compiler_params=pltpu.CompilerParams(
            dimension_semantics=("parallel", "arbitrary"),
            vmem_limit_bytes=vmem_limit),
    )(x, x, pad, lp['wq'], lp['wkv'], lp['wo'], lp['w1'], lp['w2'],
      lp['g1'], lp['b1'], lp['g2'], lp['b2'])


# ----------------------------------------------------------------------------
# Host-side parameter prep: pre-transpose / fuse / cast once (never per call).
# ----------------------------------------------------------------------------
def prep_layer_params(lp, *, num_heads, d_k, d_v, compute_dtype=jnp.bfloat16):
    E = lp['wq'].shape[1]
    scale = 1.0 / math.sqrt(d_k)
    return dict(
        wq=(lp['wq'] * scale).T.astype(compute_dtype),                        # [E, H*dk]
        wkv=jnp.concatenate([lp['wk'].T, lp['wv'].T], axis=1
                            ).astype(compute_dtype),                          # [E, H*(dk+dv)]
        wo=lp['wfc'].T.astype(compute_dtype),                                 # [H*dv, E]
        w1=lp['w1'].T.astype(compute_dtype),                                  # [E, d_ff]
        w2=lp['w2'].T.astype(compute_dtype),                                  # [d_ff, E]
        g1=lp['g1'].reshape(1, E), b1=lp['b1'].reshape(1, E),
        g2=lp['g2'].reshape(1, E), b2=lp['b2'].reshape(1, E),
        num_heads=num_heads, d_k=d_k, d_v=d_v,
    )


# ----------------------------------------------------------------------------
# Full Decoder forward (positional embeddings + pad vector + layer stack).
# ----------------------------------------------------------------------------
def decoder_forward(x, t_pos, s_pos, prepped_layers, *, num_frames, num_tokens,
                    tq, attn_dtype=jnp.float32):
    B, L, E = x.shape
    # t_pos_emb.repeat(1,1,num_tokens).view(1,-1,E)[:, :L]: each frame embedding
    # repeated num_tokens consecutive times; s_pos tiled num_frames times.
    t_emb = jnp.repeat(t_pos, num_tokens, axis=1)[:, :L, :]
    s_emb = jnp.tile(s_pos, (1, num_frames, 1))[:, :L, :]
    x = x + t_emb + s_emb     # trivial elementwise add, left to XLA

    # Pad mask from x AFTER the positional add — exactly what the PyTorch module
    # does (get_attn_pad_mask is called on the embedded x). Only the [B,1,L] pad
    # vector ships to the kernel; the dense causal+pad LxL mask is rebuilt
    # in-kernel from iota compares.
    pad = (x[:, :, 0] == 0).astype(jnp.float32)[:, None, :]       # [B, 1, L]

    attn_list = []
    for lp in prepped_layers:
        x, attn = decoder_layer_pallas(x, pad, lp, tq=tq, attn_dtype=attn_dtype)
        attn_list.append(attn)
    return x, attn_list


# ----------------------------------------------------------------------------
# Pure-JAX reference mirroring the PyTorch forward (eval mode, f32).
# ----------------------------------------------------------------------------
def _layer_norm_ref(x, g, b, eps=1e-5):
    mu = x.mean(-1, keepdims=True)
    var = ((x - mu) ** 2).mean(-1, keepdims=True)
    return (x - mu) / jnp.sqrt(var + eps) * g + b


def decoder_reference(x, t_pos, s_pos, raw_layers, *, num_frames, num_tokens,
                      num_heads, d_k, d_v):
    B, L, E = x.shape
    t_emb = jnp.repeat(t_pos, num_tokens, axis=1)[:, :L, :]
    s_emb = jnp.tile(s_pos, (1, num_frames, 1))[:, :L, :]
    x = x + t_emb + s_emb
    causal = jnp.triu(jnp.ones((L, L), jnp.float32), k=1)[None]
    pad = (x[:, :, 0] == 0).astype(jnp.float32)[:, None, :]
    mask = (causal + pad) > 0

    attns = []
    for lp in raw_layers:
        Q = (x @ lp['wq'].T).reshape(B, L, num_heads, d_k).transpose(0, 2, 1, 3)
        K = (x @ lp['wk'].T).reshape(B, L, num_heads, d_k).transpose(0, 2, 1, 3)
        V = (x @ lp['wv'].T).reshape(B, L, num_heads, d_v).transpose(0, 2, 1, 3)
        s = jnp.einsum('bhqd,bhkd->bhqk', Q, K) / math.sqrt(d_k)
        s = jnp.where(mask[:, None, :, :], -1e9, s)
        a = jax.nn.softmax(s, axis=-1)
        ctx = jnp.einsum('bhqk,bhkd->bhqd', a, V).transpose(0, 2, 1, 3).reshape(B, L, -1)
        y = _layer_norm_ref(ctx @ lp['wfc'].T + x, lp['g1'], lp['b1'])
        h = jnp.maximum(y @ lp['w1'].T, 0.0) @ lp['w2'].T
        x = _layer_norm_ref(h + y, lp['g2'], lp['b2'])
        attns.append(a)
    return x, attns


if __name__ == "__main__":
    # Small shapes consistent with the module's forward.
    B, L = 2, 16
    num_layers = 2
    embed_dim, d_k, d_v, d_ff, num_heads = 32, 16, 16, 64, 4
    num_frames, num_tokens = 4, 4            # num_frames * num_tokens == L
    tq = 8                                   # grid = (B, L // tq) = (2, 2)

    key = jax.random.PRNGKey(0)
    key, kx, kt, ks = jax.random.split(key, 4)
    x = jax.random.normal(kx, (B, L, embed_dim), jnp.float32)
    # The module inits these to zeros; small randoms to exercise the path.
    t_pos = 0.02 * jax.random.normal(kt, (1, num_frames, embed_dim), jnp.float32)
    s_pos = 0.02 * jax.random.normal(ks, (1, num_tokens, embed_dim), jnp.float32)

    def init_linear(rng, out_f, in_f):
        lim = 1.0 / math.sqrt(in_f)
        return jax.random.uniform(rng, (out_f, in_f), jnp.float32, -lim, lim)

    raw_layers = []
    for _ in range(num_layers):
        key, k1, k2, k3, k4, k5, k6, k7, k8 = jax.random.split(key, 9)
        raw_layers.append(dict(
            wq=init_linear(k1, num_heads * d_k, embed_dim),
            wk=init_linear(k2, num_heads * d_k, embed_dim),
            wv=init_linear(k3, num_heads * d_v, embed_dim),
            wfc=init_linear(k4, embed_dim, num_heads * d_v),
            w1=init_linear(k5, d_ff, embed_dim),
            w2=init_linear(k6, embed_dim, d_ff),
            g1=1.0 + 0.1 * jax.random.normal(k7, (embed_dim,), jnp.float32),
            b1=0.1 * jax.random.normal(k8, (embed_dim,), jnp.float32),
            g2=jnp.ones((embed_dim,), jnp.float32),
            b2=jnp.zeros((embed_dim,), jnp.float32),
        ))

    ref_out, ref_attns = decoder_reference(
        x, t_pos, s_pos, raw_layers,
        num_frames=num_frames, num_tokens=num_tokens,
        num_heads=num_heads, d_k=d_k, d_v=d_v)

    # --- exactness check: f32 compute path, f32 attention writeback ---
    prepped_f32 = [prep_layer_params(lp, num_heads=num_heads, d_k=d_k, d_v=d_v,
                                     compute_dtype=jnp.float32) for lp in raw_layers]
    out32, attns32 = decoder_forward(x, t_pos, s_pos, prepped_f32,
                                     num_frames=num_frames, num_tokens=num_tokens,
                                     tq=tq, attn_dtype=jnp.float32)
    jax.block_until_ready((out32, attns32))
    assert jnp.allclose(out32, ref_out, atol=2e-3, rtol=2e-3)
    for a, ra in zip(attns32, ref_attns):
        assert jnp.allclose(a, ra, atol=5e-4, rtol=1e-3)

    # --- production path: bf16 MXU matmuls (f32 accumulation / softmax / LN)
    #     and bf16 attention-probability writeback (per perf review) ---
    prepped_bf16 = [prep_layer_params(lp, num_heads=num_heads, d_k=d_k, d_v=d_v,
                                      compute_dtype=jnp.bfloat16) for lp in raw_layers]
    out16, attns16 = decoder_forward(x, t_pos, s_pos, prepped_bf16,
                                     num_frames=num_frames, num_tokens=num_tokens,
                                     tq=tq, attn_dtype=jnp.bfloat16)
    jax.block_until_ready((out16, attns16))
    assert jnp.allclose(out16, ref_out, atol=6e-2, rtol=6e-2)
    for a, ra in zip(attns16, ref_attns):
        assert jnp.allclose(a.astype(jnp.float32), ra, atol=2e-2, rtol=2e-2)

    print("KERNEL_OK")
</pallas_src>

<mosaic_0001>
module attributes {stable_mosaic.version = 11 : i64} {
  func.func @decoder_layer_kernel(%arg0: i32, %arg1: i32, %arg2: memref<1x16x32xf32, #tpu.memory_space<vmem>>, %arg3: memref<1x8x32xf32, #tpu.memory_space<vmem>>, %arg4: memref<1x1x16xf32, #tpu.memory_space<vmem>>, %arg5: memref<32x64xf32, #tpu.memory_space<vmem>>, %arg6: memref<32x128xf32, #tpu.memory_space<vmem>>, %arg7: memref<64x32xf32, #tpu.memory_space<vmem>>, %arg8: memref<32x64xf32, #tpu.memory_space<vmem>>, %arg9: memref<64x32xf32, #tpu.memory_space<vmem>>, %arg10: memref<1x32xf32, #tpu.memory_space<vmem>>, %arg11: memref<1x32xf32, #tpu.memory_space<vmem>>, %arg12: memref<1x32xf32, #tpu.memory_space<vmem>>, %arg13: memref<1x32xf32, #tpu.memory_space<vmem>>, %arg14: memref<1x8x32xf32, #tpu.memory_space<vmem>>, %arg15: memref<1x4x8x16xf32, #tpu.memory_space<vmem>>, %arg16: memref<4x16x16xf32, #tpu.memory_space<vmem>>, %arg17: memref<4x16x16xf32, #tpu.memory_space<vmem>>) attributes {dimension_semantics = [#tpu.dimension_semantics<parallel>, #tpu.dimension_semantics<arbitrary>], iteration_bounds = array<i64: 2, 2>, scalar_prefetch = 0 : i64, scratch_operands = 2 : i64, tpu.core_type = #tpu.core_type<tc>, window_params = [{transform_indices = @transform_0, window_bounds = array<i64: 1, 16, 32>}, {transform_indices = @transform_1, window_bounds = array<i64: 1, 8, 32>}, {transform_indices = @transform_2, window_bounds = array<i64: 1, 1, 16>}, {pipeline_mode = #tpu.pipeline_mode<synchronous>, transform_indices = @transform_3, window_bounds = array<i64: 32, 64>}, {pipeline_mode = #tpu.pipeline_mode<synchronous>, transform_indices = @transform_4, window_bounds = array<i64: 32, 128>}, {pipeline_mode = #tpu.pipeline_mode<synchronous>, transform_indices = @transform_5, window_bounds = array<i64: 64, 32>}, {pipeline_mode = #tpu.pipeline_mode<synchronous>, transform_indices = @transform_6, window_bounds = array<i64: 32, 64>}, {pipeline_mode = #tpu.pipeline_mode<synchronous>, transform_indices = @transform_7, window_bounds = array<i64: 64, 32>}, {pipeline_mode = #tpu.pipeline_mode<synchronous>, transform_indices = @transform_8, window_bounds = array<i64: 1, 32>}, {pipeline_mode = #tpu.pipeline_mode<synchronous>, transform_indices = @transform_9, window_bounds = array<i64: 1, 32>}, {pipeline_mode = #tpu.pipeline_mode<synchronous>, transform_indices = @transform_10, window_bounds = array<i64: 1, 32>}, {pipeline_mode = #tpu.pipeline_mode<synchronous>, transform_indices = @transform_11, window_bounds = array<i64: 1, 32>}, {transform_indices = @transform_12, window_bounds = array<i64: 1, 8, 32>}, {transform_indices = @transform_13, window_bounds = array<i64: 1, 4, 8, 16>}]} {
    %c0_i32 = arith.constant 0 : i32
    %0 = arith.cmpi eq, %arg1, %c0_i32 : i32
    %1 = arith.extui %0 : i1 to i32
    %c0_i32_0 = arith.constant 0 : i32
    %2 = arith.cmpi ne, %1, %c0_i32_0 : i32
    scf.if %2 {
      %c0_101 = arith.constant 0 : index
      %c0_102 = arith.constant 0 : index
      %c0_103 = arith.constant 0 : index
      %201 = vector.load %arg2[%c0_101, %c0_102, %c0_103] : memref<1x16x32xf32, #tpu.memory_space<vmem>>, vector<1x16x32xf32>
      %202 = vector.shape_cast %201 : vector<1x16x32xf32> to vector<16x32xf32>
      %c0_104 = arith.constant 0 : index
      %c0_105 = arith.constant 0 : index
      %203 = vector.load %arg6[%c0_104, %c0_105] : memref<32x128xf32, #tpu.memory_space<vmem>>, vector<32x128xf32>
      %cst_106 = arith.constant dense<0.000000e+00> : vector<16x128xf32>
      %204 = tpu.matmul %202, %203, %cst_106 {dimension_numbers = #tpu.dot_dimension_numbers<[1], [0], [0], [1], [0, 0, 1, 1], [], []>} : vector<16x32xf32>, vector<32x128xf32>, vector<16x128xf32> -> vector<16x128xf32>
      %205 = vector.extract_strided_slice %204 {offsets = [0, 0], sizes = [16, 16], strides = [1, 1]} : vector<16x128xf32> to vector<16x16xf32>
      %c0_107 = arith.constant 0 : index
      %c0_108 = arith.constant 0 : index
      %c0_109 = arith.constant 0 : index
      %206 = vector.load %arg16[%c0_107, %c0_108, %c0_109] : memref<4x16x16xf32, #tpu.memory_space<vmem>>, vector<1x16x16xf32>
      %207 = vector.shape_cast %206 : vector<1x16x16xf32> to vector<16x16xf32>
      %208 = vector.shape_cast %205 : vector<16x16xf32> to vector<1x16x16xf32>
      tpu.vector_store %arg16[%c0_107, %c0_108, %c0_109], %208 {strides = array<i32>} : memref<4x16x16xf32, #tpu.memory_space<vmem>>, vector<1x16x16xf32>,
      %209 = vector.extract_strided_slice %204 {offsets = [0, 64], sizes = [16, 16], strides = [1, 1]} : vector<16x128xf32> to vector<16x16xf32>
      %c0_110 = arith.constant 0 : index
      %c0_111 = arith.constant 0 : index
      %c0_112 = arith.constant 0 : index
      %210 = vector.load %arg17[%c0_110, %c0_111, %c0_112] : memref<4x16x16xf32, #tpu.memory_space<vmem>>, vector<1x16x16xf32>
      %211 = vector.shape_cast %210 : vector<1x16x16xf32> to vector<16x16xf32>
      %212 = vector.shape_cast %209 : vector<16x16xf32> to vector<1x16x16xf32>
      tpu.vector_store %arg17[%c0_110, %c0_111, %c0_112], %212 {strides = array<i32>} : memref<4x16x16xf32, #tpu.memory_space<vmem>>, vector<1x16x16xf32>,
      %213 = vector.extract_strided_slice %204 {offsets = [0, 16], sizes = [16, 16], strides = [1, 1]} : vector<16x128xf32> to vector<16x16xf32>
      %c1_113 = arith.constant 1 : index
      %c0_114 = arith.constant 0 : index
      %c0_115 = arith.constant 0 : index
      %214 = vector.load %arg16[%c1_113, %c0_114, %c0_115] : memref<4x16x16xf32, #tpu.memory_space<vmem>>, vector<1x16x16xf32>
      %215 = vector.shape_cast %214 : vector<1x16x16xf32> to vector<16x16xf32>
      %216 = vector.shape_cast %213 : vector<16x16xf32> to vector<1x16x16xf32>
      tpu.vector_store %arg16[%c1_113, %c0_114, %c0_115], %216 {strides = array<i32>} : memref<4x16x16xf32, #tpu.memory_space<vmem>>, vector<1x16x16xf32>,
      %217 = vector.extract_strided_slice %204 {offsets = [0, 80], sizes = [16, 16], strides = [1, 1]} : vector<16x128xf32> to vector<16x16xf32>
      %c1_116 = arith.constant 1 : index
      %c0_117 = arith.constant 0 : index
      %c0_118 = arith.constant 0 : index
      %218 = vector.load %arg17[%c1_116, %c0_117, %c0_118] : memref<4x16x16xf32, #tpu.memory_space<vmem>>, vector<1x16x16xf32>
      %219 = vector.shape_cast %218 : vector<1x16x16xf32> to vector<16x16xf32>
      %220 = vector.shape_cast %217 : vector<16x16xf32> to vector<1x16x16xf32>
      tpu.vector_store %arg17[%c1_116, %c0_117, %c0_118], %220 {strides = array<i32>} : memref<4x16x16xf32, #tpu.memory_space<vmem>>, vector<1x16x16xf32>,
      %221 = vector.extract_strided_slice %204 {offsets = [0, 32], sizes = [16, 16], strides = [1, 1]} : vector<16x128xf32> to vector<16x16xf32>
      %c2_119 = arith.constant 2 : index
      %c0_120 = arith.constant 0 : index
      %c0_121 = arith.constant 0 : index
      %222 = vector.load %arg16[%c2_119, %c0_120, %c0_121] : memref<4x16x16xf32, #tpu.memory_space<vmem>>, vector<1x16x16xf32>
      %223 = vector.shape_cast %222 : vector<1x16x16xf32> to vector<16x16xf32>
      %224 = vector.shape_cast %221 : vector<16x16xf32> to vector<1x16x16xf32>
      tpu.vector_store %arg16[%c2_119, %c0_120, %c0_121], %224 {strides = array<i32>} : memref<4x16x16xf32, #tpu.memory_space<vmem>>, vector<1x16x16xf32>,
      %225 = vector.extract_strided_slice %204 {offsets = [0, 96], sizes = [16, 16], strides = [1, 1]} : vector<16x128xf32> to vector<16x16xf32>
      %c2_122 = arith.constant 2 : index
      %c0_123 = arith.constant 0 : index
      %c0_124 = arith.constant 0 : index
      %226 = vector.load %arg17[%c2_122, %c0_123, %c0_124] : memref<4x16x16xf32, #tpu.memory_space<vmem>>, vector<1x16x16xf32>
      %227 = vector.shape_cast %226 : vector<1x16x16xf32> to vector<16x16xf32>
      %228 = vector.shape_cast %225 : vector<16x16xf32> to vector<1x16x16xf32>
      tpu.vector_store %arg17[%c2_122, %c0_123, %c0_124], %228 {strides = array<i32>} : memref<4x16x16xf32, #tpu.memory_space<vmem>>, vector<1x16x16xf32>,
      %229 = vector.extract_strided_slice %204 {offsets = [0, 48], sizes = [16, 16], strides = [1, 1]} : vector<16x128xf32> to vector<16x16xf32>
      %c3_125 = arith.constant 3 : index
      %c0_126 = arith.constant 0 : index
      %c0_127 = arith.constant 0 : index
      %230 = vector.load %arg16[%c3_125, %c0_126, %c0_127] : memref<4x16x16xf32, #tpu.memory_space<vmem>>, vector<1x16x16xf32>
      %231 = vector.shape_cast %230 : vector<1x16x16xf32> to vector<16x16xf32>
      %232 = vector.shape_cast %229 : vector<16x16xf32> to vector<1x16x16xf32>
      tpu.vector_store %arg16[%c3_125, %c0_126, %c0_127], %232 {strides = array<i32>} : memref<4x16x16xf32, #tpu.memory_space<vmem>>, vector<1x16x16xf32>,
      %233 = vector.extract_strided_slice %204 {offsets = [0, 112], sizes = [16, 16], strides = [1, 1]} : vector<16x128xf32> to vector<16x16xf32>
      %c3_128 = arith.constant 3 : index
      %c0_129 = arith.constant 0 : index
      %c0_130 = arith.constant 0 : index
      %234 = vector.load %arg17[%c3_128, %c0_129, %c0_130] : memref<4x16x16xf32, #tpu.memory_space<vmem>>, vector<1x16x16xf32>
      %235 = vector.shape_cast %234 : vector<1x16x16xf32> to vector<16x16xf32>
      %236 = vector.shape_cast %233 : vector<16x16xf32> to vector<1x16x16xf32>
      tpu.vector_store %arg17[%c3_128, %c0_129, %c0_130], %236 {strides = array<i32>} : memref<4x16x16xf32, #tpu.memory_space<vmem>>, vector<1x16x16xf32>,
    } else {
    }
    %c0 = arith.constant 0 : index
    %c0_1 = arith.constant 0 : index
    %c0_2 = arith.constant 0 : index
    %3 = vector.load %arg3[%c0, %c0_1, %c0_2] : memref<1x8x32xf32, #tpu.memory_space<vmem>>, vector<1x8x32xf32>
    %4 = vector.shape_cast %3 : vector<1x8x32xf32> to vector<8x32xf32>
    %c0_3 = arith.constant 0 : index
    %c0_4 = arith.constant 0 : index
    %5 = vector.load %arg5[%c0_3, %c0_4] : memref<32x64xf32, #tpu.memory_space<vmem>>, vector<32x64xf32>
    %cst = arith.constant dense<0.000000e+00> : vector<8x64xf32>
    %6 = tpu.matmul %4, %5, %cst {dimension_numbers = #tpu.dot_dimension_numbers<[1], [0], [0], [1], [0, 0, 1, 1], [], []>} : vector<8x32xf32>, vector<32x64xf32>, vector<8x64xf32> -> vector<8x64xf32>
    %c8_i32 = arith.constant 8 : i32
    %7 = arith.muli %arg1, %c8_i32 : i32
    %8 = tpu.iota {dimensions = array<i32: 0>} : vector<8x16xi32>
    %9 = vector.broadcast %7 : i32 to vector<8x16xi32>
    %10 = arith.addi %8, %9 : vector<8x16xi32>
    %11 = tpu.iota {dimensions = array<i32: 1>} : vector<8x16xi32>
    %12 = arith.cmpi sgt, %11, %10 : vector<8x16xi32>
    %c0_5 = arith.constant 0 : index
    %c0_6 = arith.constant 0 : index
    %c0_7 = arith.constant 0 : index
    %13 = vector.load %arg4[%c0_5, %c0_6, %c0_7] : memref<1x1x16xf32, #tpu.memory_space<vmem>>, vector<1x1x16xf32>
    %14 = vector.shape_cast %13 : vector<1x1x16xf32> to vector<1x16xf32>
    %cst_8 = arith.constant 0.000000e+00 : f32
    %15 = vector.broadcast %cst_8 : f32 to vector<1x16xf32>
    %16 = arith.cmpf ogt, %14, %15 : vector<1x16xf32>
    %17 = vector.broadcast %16 : vector<1x16xi1> to vector<8x16xi1>
    %18 = arith.ori %12, %17 : vector<8x16xi1>
    %19 = vector.extract_strided_slice %6 {offsets = [0, 0], sizes = [8, 16], strides = [1, 1]} : vector<8x64xf32> to vector<8x16xf32>
    %c0_9 = arith.constant 0 : index
    %c0_10 = arith.constant 0 : index
    %c0_11 = arith.constant 0 : index
    %20 = vector.load %arg16[%c0_9, %c0_10, %c0_11] : memref<4x16x16xf32, #tpu.memory_space<vmem>>, vector<1x16x16xf32>
    %21 = vector.shape_cast %20 : vector<1x16x16xf32> to vector<16x16xf32>
    %cst_12 = arith.constant dense<0.000000e+00> : vector<8x16xf32>
    %22 = tpu.matmul %19, %21, %cst_12 {dimension_numbers = #tpu.dot_dimension_numbers<[1], [1], [0], [0], [0, 0, 1, 0], [], []>} : vector<8x16xf32>, vector<16x16xf32>, vector<8x16xf32> -> vector<8x16xf32>
    %cst_13 = arith.constant -1.000000e+09 : f32
    %23 = vector.broadcast %cst_13 : f32 to vector<8x16xf32>
    %24 = arith.select %18, %23, %22 : vector<8x16xi1>, vector<8x16xf32>
    %cst_14 = arith.constant dense<0xFF800000> : vector<8xf32>
    %25 = vector.multi_reduction <maximumf>, %24, %cst_14 [1] : vector<8x16xf32> to vector<8xf32>
    %26 = vector.shape_cast %25 : vector<8xf32> to vector<8x1xf32>
    %27 = vector.broadcast %26 : vector<8x1xf32> to vector<8x16xf32>
    %28 = arith.subf %24, %27 : vector<8x16xf32>
    %29 = math.exp %28 : vector<8x16xf32>
    %cst_15 = arith.constant dense<0.000000e+00> : vector<8xf32>
    %30 = vector.multi_reduction <add>, %29, %cst_15 [1] : vector<8x16xf32> to vector<8xf32>
    %31 = vector.shape_cast %30 : vector<8xf32> to vector<8x1xf32>
    %32 = tpu.reciprocal %31 {approx = true} : vector<8x1xf32> -> vector<8x1xf32>
    %33 = arith.mulf %31, %32 : vector<8x1xf32>
    %cst_16 = arith.constant 2.000000e+00 : f32
    %34 = vector.broadcast %cst_16 : f32 to vector<8x1xf32>
    %35 = arith.subf %34, %33 : vector<8x1xf32>
    %36 = arith.mulf %32, %35 : vector<8x1xf32>
    %37 = vector.broadcast %36 : vector<8x1xf32> to vector<8x16xf32>
    %38 = arith.mulf %29, %37 : vector<8x16xf32>
    %c0_17 = arith.constant 0 : index
    %c0_18 = arith.constant 0 : index
    %c0_19 = arith.constant 0 : index
    %c0_20 = arith.constant 0 : index
    %39 = vector.load %arg15[%c0_17, %c0_18, %c0_19, %c0_20] : memref<1x4x8x16xf32, #tpu.memory_space<vmem>>, vector<1x1x8x16xf32>
    %40 = vector.shape_cast %39 : vector<1x1x8x16xf32> to vector<8x16xf32>
    %41 = vector.shape_cast %38 : vector<8x16xf32> to vector<1x1x8x16xf32>
    tpu.vector_store %arg15[%c0_17, %c0_18, %c0_19, %c0_20], %41 {strides = array<i32>} : memref<1x4x8x16xf32, #tpu.memory_space<vmem>>, vector<1x1x8x16xf32>,
    %c0_21 = arith.constant 0 : index
    %c0_22 = arith.constant 0 : index
    %c0_23 = arith.constant 0 : index
    %42 = vector.load %arg17[%c0_21, %c0_22, %c0_23] : memref<4x16x16xf32, #tpu.memory_space<vmem>>, vector<1x16x16xf32>
    %43 = vector.shape_cast %42 : vector<1x16x16xf32> to vector<16x16xf32>
    %cst_24 = arith.constant dense<0.000000e+00> : vector<8x16xf32>
    %44 = tpu.matmul %29, %43, %cst_24 {dimension_numbers = #tpu.dot_dimension_numbers<[1], [0], [0], [1], [0, 0, 1, 1], [], []>} : vector<8x16xf32>, vector<16x16xf32>, vector<8x16xf32> -> vector<8x16xf32>
    %45 = vector.broadcast %36 : vector<8x1xf32> to vector<8x16xf32>
    %46 = arith.mulf %44, %45 : vector<8x16xf32>
    %47 = vector.extract_strided_slice %6 {offsets = [0, 16], sizes = [8, 16], strides = [1, 1]} : vector<8x64xf32> to vector<8x16xf32>
    %c1 = arith.constant 1 : index
    %c0_25 = arith.constant 0 : index
    %c0_26 = arith.constant 0 : index
    %48 = vector.load %arg16[%c1, %c0_25, %c0_26] : memref<4x16x16xf32, #tpu.memory_space<vmem>>, vector<1x16x16xf32>
    %49 = vector.shape_cast %48 : vector<1x16x16xf32> to vector<16x16xf32>
    %cst_27 = arith.constant dense<0.000000e+00> : vector<8x16xf32>
    %50 = tpu.matmul %47, %49, %cst_27 {dimension_numbers = #tpu.dot_dimension_numbers<[1], [1], [0], [0], [0, 0, 1, 0], [], []>} : vector<8x16xf32>, vector<16x16xf32>, vector<8x16xf32> -> vector<8x16xf32>
    %cst_28 = arith.constant -1.000000e+09 : f32
    %51 = vector.broadcast %cst_28 : f32 to vector<8x16xf32>
    %52 = arith.select %18, %51, %50 : vector<8x16xi1>, vector<8x16xf32>
    %cst_29 = arith.constant dense<0xFF800000> : vector<8xf32>
    %53 = vector.multi_reduction <maximumf>, %52, %cst_29 [1] : vector<8x16xf32> to vector<8xf32>
    %54 = vector.shape_cast %53 : vector<8xf32> to vector<8x1xf32>
    %55 = vector.broadcast %54 : vector<8x1xf32> to vector<8x16xf32>
    %56 = arith.subf %52, %55 : vector<8x16xf32>
    %57 = math.exp %56 : vector<8x16xf32>
    %cst_30 = arith.constant dense<0.000000e+00> : vector<8xf32>
    %58 = vector.multi_reduction <add>, %57, %cst_30 [1] : vector<8x16xf32> to vector<8xf32>
    %59 = vector.shape_cast %58 : vector<8xf32> to vector<8x1xf32>
    %60 = tpu.reciprocal %59 {approx = true} : vector<8x1xf32> -> vector<8x1xf32>
    %61 = arith.mulf %59, %60 : vector<8x1xf32>
    %cst_31 = arith.constant 2.000000e+00 : f32
    %62 = vector.broadcast %cst_31 : f32 to vector<8x1xf32>
    %63 = arith.subf %62, %61 : vector<8x1xf32>
    %64 = arith.mulf %60, %63 : vector<8x1xf32>
    %65 = vector.broadcast %64 : vector<8x1xf32> to vector<8x16xf32>
    %66 = arith.mulf %57, %65 : vector<8x16xf32>
    %c0_32 = arith.constant 0 : index
    %c1_33 = arith.constant 1 : index
    %c0_34 = arith.constant 0 : index
    %c0_35 = arith.constant 0 : index
    %67 = vector.load %arg15[%c0_32, %c1_33, %c0_34, %c0_35] : memref<1x4x8x16xf32, #tpu.memory_space<vmem>>, vector<1x1x8x16xf32>
    %68 = vector.shape_cast %67 : vector<1x1x8x16xf32> to vector<8x16xf32>
    %69 = vector.shape_cast %66 : vector<8x16xf32> to vector<1x1x8x16xf32>
    tpu.vector_store %arg15[%c0_32, %c1_33, %c0_34, %c0_35], %69 {strides = array<i32>} : memref<1x4x8x16xf32, #tpu.memory_space<vmem>>, vector<1x1x8x16xf32>,
    %c1_36 = arith.constant 1 : index
    %c0_37 = arith.constant 0 : index
    %c0_38 = arith.constant 0 : index
    %70 = vector.load %arg17[%c1_36, %c0_37, %c0_38] : memref<4x16x16xf32, #tpu.memory_space<vmem>>, vector<1x16x16xf32>
    %71 = vector.shape_cast %70 : vector<1x16x16xf32> to vector<16x16xf32>
    %cst_39 = arith.constant dense<0.000000e+00> : vector<8x16xf32>
    %72 = tpu.matmul %57, %71, %cst_39 {dimension_numbers = #tpu.dot_dimension_numbers<[1], [0], [0], [1], [0, 0, 1, 1], [], []>} : vector<8x16xf32>, vector<16x16xf32>, vector<8x16xf32> -> vector<8x16xf32>
    %73 = vector.broadcast %64 : vector<8x1xf32> to vector<8x16xf32>
    %74 = arith.mulf %72, %73 : vector<8x16xf32>
    %75 = vector.extract_strided_slice %6 {offsets = [0, 32], sizes = [8, 16], strides = [1, 1]} : vector<8x64xf32> to vector<8x16xf32>
    %c2 = arith.constant 2 : index
    %c0_40 = arith.constant 0 : index
    %c0_41 = arith.constant 0 : index
    %76 = vector.load %arg16[%c2, %c0_40, %c0_41] : memref<4x16x16xf32, #tpu.memory_space<vmem>>, vector<1x16x16xf32>
    %77 = vector.shape_cast %76 : vector<1x16x16xf32> to vector<16x16xf32>
    %cst_42 = arith.constant dense<0.000000e+00> : vector<8x16xf32>
    %78 = tpu.matmul %75, %77, %cst_42 {dimension_numbers = #tpu.dot_dimension_numbers<[1], [1], [0], [0], [0, 0, 1, 0], [], []>} : vector<8x16xf32>, vector<16x16xf32>, vector<8x16xf32> -> vector<8x16xf32>
    %cst_43 = arith.constant -1.000000e+09 : f32
    %79 = vector.broadcast %cst_43 : f32 to vector<8x16xf32>
    %80 = arith.select %18, %79, %78 : vector<8x16xi1>, vector<8x16xf32>
    %cst_44 = arith.constant dense<0xFF800000> : vector<8xf32>
    %81 = vector.multi_reduction <maximumf>, %80, %cst_44 [1] : vector<8x16xf32> to vector<8xf32>
    %82 = vector.shape_cast %81 : vector<8xf32> to vector<8x1xf32>
    %83 = vector.broadcast %82 : vector<8x1xf32> to vector<8x16xf32>
    %84 = arith.subf %80, %83 : vector<8x16xf32>
    %85 = math.exp %84 : vector<8x16xf32>
    %cst_45 = arith.constant dense<0.000000e+00> : vector<8xf32>
    %86 = vector.multi_reduction <add>, %85, %cst_45 [1] : vector<8x16xf32> to vector<8xf32>
    %87 = vector.shape_cast %86 : vector<8xf32> to vector<8x1xf32>
    %88 = tpu.reciprocal %87 {approx = true} : vector<8x1xf32> -> vector<8x1xf32>
    %89 = arith.mulf %87, %88 : vector<8x1xf32>
    %cst_46 = arith.constant 2.000000e+00 : f32
    %90 = vector.broadcast %cst_46 : f32 to vector<8x1xf32>
    %91 = arith.subf %90, %89 : vector<8x1xf32>
    %92 = arith.mulf %88, %91 : vector<8x1xf32>
    %93 = vector.broadcast %92 : vector<8x1xf32> to vector<8x16xf32>
    %94 = arith.mulf %85, %93 : vector<8x16xf32>
    %c0_47 = arith.constant 0 : index
    %c2_48 = arith.constant 2 : index
    %c0_49 = arith.constant 0 : index
    %c0_50 = arith.constant 0 : index
    %95 = vector.load %arg15[%c0_47, %c2_48, %c0_49, %c0_50] : memref<1x4x8x16xf32, #tpu.memory_space<vmem>>, vector<1x1x8x16xf32>
    %96 = vector.shape_cast %95 : vector<1x1x8x16xf32> to vector<8x16xf32>
    %97 = vector.shape_cast %94 : vector<8x16xf32> to vector<1x1x8x16xf32>
    tpu.vector_store %arg15[%c0_47, %c2_48, %c0_49, %c0_50], %97 {strides = array<i32>} : memref<1x4x8x16xf32, #tpu.memory_space<vmem>>, vector<1x1x8x16xf32>,
    %c2_51 = arith.constant 2 : index
    %c0_52 = arith.constant 0 : index
    %c0_53 = arith.constant 0 : index
    %98 = vector.load %arg17[%c2_51, %c0_52, %c0_53] : memref<4x16x16xf32, #tpu.memory_space<vmem>>, vector<1x16x16xf32>
    %99 = vector.shape_cast %98 : vector<1x16x16xf32> to vector<16x16xf32>
    %cst_54 = arith.constant dense<0.000000e+00> : vector<8x16xf32>
    %100 = tpu.matmul %85, %99, %cst_54 {dimension_numbers = #tpu.dot_dimension_numbers<[1], [0], [0], [1], [0, 0, 1, 1], [], []>} : vector<8x16xf32>, vector<16x16xf32>, vector<8x16xf32> -> vector<8x16xf32>
    %101 = vector.broadcast %92 : vector<8x1xf32> to vector<8x16xf32>
    %102 = arith.mulf %100, %101 : vector<8x16xf32>
    %103 = vector.extract_strided_slice %6 {offsets = [0, 48], sizes = [8, 16], strides = [1, 1]} : vector<8x64xf32> to vector<8x16xf32>
    %c3 = arith.constant 3 : index
    %c0_55 = arith.constant 0 : index
    %c0_56 = arith.constant 0 : index
    %104 = vector.load %arg16[%c3, %c0_55, %c0_56] : memref<4x16x16xf32, #tpu.memory_space<vmem>>, vector<1x16x16xf32>
    %105 = vector.shape_cast %104 : vector<1x16x16xf32> to vector<16x16xf32>
    %cst_57 = arith.constant dense<0.000000e+00> : vector<8x16xf32>
    %106 = tpu.matmul %103, %105, %cst_57 {dimension_numbers = #tpu.dot_dimension_numbers<[1], [1], [0], [0], [0, 0, 1, 0], [], []>} : vector<8x16xf32>, vector<16x16xf32>, vector<8x16xf32> -> vector<8x16xf32>
    %cst_58 = arith.constant -1.000000e+09 : f32
    %107 = vector.broadcast %cst_58 : f32 to vector<8x16xf32>
    %108 = arith.select %18, %107, %106 : vector<8x16xi1>, vector<8x16xf32>
    %cst_59 = arith.constant dense<0xFF800000> : vector<8xf32>
    %109 = vector.multi_reduction <maximumf>, %108, %cst_59 [1] : vector<8x16xf32> to vector<8xf32>
    %110 = vector.shape_cast %109 : vector<8xf32> to vector<8x1xf32>
    %111 = vector.broadcast %110 : vector<8x1xf32> to vector<8x16xf32>
    %112 = arith.subf %108, %111 : vector<8x16xf32>
    %113 = math.exp %112 : vector<8x16xf32>
    %cst_60 = arith.constant dense<0.000000e+00> : vector<8xf32>
    %114 = vector.multi_reduction <add>, %113, %cst_60 [1] : vector<8x16xf32> to vector<8xf32>
    %115 = vector.shape_cast %114 : vector<8xf32> to vector<8x1xf32>
    %116 = tpu.reciprocal %115 {approx = true} : vector<8x1xf32> -> vector<8x1xf32>
    %117 = arith.mulf %115, %116 : vector<8x1xf32>
    %cst_61 = arith.constant 2.000000e+00 : f32
    %118 = vector.broadcast %cst_61 : f32 to vector<8x1xf32>
    %119 = arith.subf %118, %117 : vector<8x1xf32>
    %120 = arith.mulf %116, %119 : vector<8x1xf32>
    %121 = vector.broadcast %120 : vector<8x1xf32> to vector<8x16xf32>
    %122 = arith.mulf %113, %121 : vector<8x16xf32>
    %c0_62 = arith.constant 0 : index
    %c3_63 = arith.constant 3 : index
    %c0_64 = arith.constant 0 : index
    %c0_65 = arith.constant 0 : index
    %123 = vector.load %arg15[%c0_62, %c3_63, %c0_64, %c0_65] : memref<1x4x8x16xf32, #tpu.memory_space<vmem>>, vector<1x1x8x16xf32>
    %124 = vector.shape_cast %123 : vector<1x1x8x16xf32> to vector<8x16xf32>
    %125 = vector.shape_cast %122 : vector<8x16xf32> to vector<1x1x8x16xf32>
    tpu.vector_store %arg15[%c0_62, %c3_63, %c0_64, %c0_65], %125 {strides = array<i32>} : memref<1x4x8x16xf32, #tpu.memory_space<vmem>>, vector<1x1x8x16xf32>,
    %c3_66 = arith.constant 3 : index
    %c0_67 = arith.constant 0 : index
    %c0_68 = arith.constant 0 : index
    %126 = vector.load %arg17[%c3_66, %c0_67, %c0_68] : memref<4x16x16xf32, #tpu.memory_space<vmem>>, vector<1x16x16xf32>
    %127 = vector.shape_cast %126 : vector<1x16x16xf32> to vector<16x16xf32>
    %cst_69 = arith.constant dense<0.000000e+00> : vector<8x16xf32>
    %128 = tpu.matmul %113, %127, %cst_69 {dimension_numbers = #tpu.dot_dimension_numbers<[1], [0], [0], [1], [0, 0, 1, 1], [], []>} : vector<8x16xf32>, vector<16x16xf32>, vector<8x16xf32> -> vector<8x16xf32>
    %129 = vector.broadcast %120 : vector<8x1xf32> to vector<8x16xf32>
    %130 = arith.mulf %128, %129 : vector<8x16xf32>
    %131 = tpu.concatenate %46, %74, %102, %130 in 1 : vector<8x16xf32>, vector<8x16xf32>, vector<8x16xf32>, vector<8x16xf32> -> vector<8x64xf32>
    %c0_70 = arith.constant 0 : index
    %c0_71 = arith.constant 0 : index
    %132 = vector.load %arg7[%c0_70, %c0_71] : memref<64x32xf32, #tpu.memory_space<vmem>>, vector<64x32xf32>
    %cst_72 = arith.constant dense<0.000000e+00> : vector<8x32xf32>
    %133 = tpu.matmul %131, %132, %cst_72 {dimension_numbers = #tpu.dot_dimension_numbers<[1], [0], [0], [1], [0, 0, 1, 1], [], []>} : vector<8x64xf32>, vector<64x32xf32>, vector<8x32xf32> -> vector<8x32xf32>
    %134 = arith.addf %133, %4 : vector<8x32xf32>
    %cst_73 = arith.constant dense<0.000000e+00> : vector<8xf32>
    %135 = vector.multi_reduction <add>, %134, %cst_73 [1] : vector<8x32xf32> to vector<8xf32>
    %136 = vector.shape_cast %135 : vector<8xf32> to vector<8x1xf32>
    %cst_74 = arith.constant 3.200000e+01 : f32
    %137 = vector.broadcast %cst_74 : f32 to vector<8x1xf32>
    %138 = arith.divf %136, %137 : vector<8x1xf32>
    %139 = vector.broadcast %138 : vector<8x1xf32> to vector<8x32xf32>
    %140 = arith.subf %134, %139 : vector<8x32xf32>
    %141 = arith.mulf %140, %140 : vector<8x32xf32>
    %cst_75 = arith.constant dense<0.000000e+00> : vector<8xf32>
    %142 = vector.multi_reduction <add>, %141, %cst_75 [1] : vector<8x32xf32> to vector<8xf32>
    %143 = vector.shape_cast %142 : vector<8xf32> to vector<8x1xf32>
    %cst_76 = arith.constant 3.200000e+01 : f32
    %144 = vector.broadcast %cst_76 : f32 to vector<8x1xf32>
    %145 = arith.divf %143, %144 : vector<8x1xf32>
    %146 = vector.broadcast %138 : vector<8x1xf32> to vector<8x32xf32>
    %147 = arith.subf %134, %146 : vector<8x32xf32>
    %cst_77 = arith.constant 9.99999974E-6 : f32
    %148 = vector.broadcast %cst_77 : f32 to vector<8x1xf32>
    %149 = arith.addf %145, %148 : vector<8x1xf32>
    %150 = math.rsqrt %149 : vector<8x1xf32>
    %151 = vector.broadcast %150 : vector<8x1xf32> to vector<8x32xf32>
    %152 = arith.mulf %147, %151 : vector<8x32xf32>
    %c0_78 = arith.constant 0 : index
    %c0_79 = arith.constant 0 : index
    %153 = vector.load %arg10[%c0_78, %c0_79] : memref<1x32xf32, #tpu.memory_space<vmem>>, vector<1x32xf32>
    %154 = vector.shape_cast %153 : vector<1x32xf32> to vector<32xf32>
    %155 = vector.shape_cast %154 : vector<32xf32> to vector<1x32xf32>
    %156 = vector.broadcast %155 : vector<1x32xf32> to vector<8x32xf32>
    %157 = arith.mulf %152, %156 : vector<8x32xf32>
    %c0_80 = arith.constant 0 : index
    %c0_81 = arith.constant 0 : index
    %158 = vector.load %arg11[%c0_80, %c0_81] : memref<1x32xf32, #tpu.memory_space<vmem>>, vector<1x32xf32>
    %159 = vector.shape_cast %158 : vector<1x32xf32> to vector<32xf32>
    %160 = vector.shape_cast %159 : vector<32xf32> to vector<1x32xf32>
    %161 = vector.broadcast %160 : vector<1x32xf32> to vector<8x32xf32>
    %162 = arith.addf %157, %161 : vector<8x32xf32>
    %c0_82 = arith.constant 0 : index
    %c0_83 = arith.constant 0 : index
    %163 = vector.load %arg8[%c0_82, %c0_83] : memref<32x64xf32, #tpu.memory_space<vmem>>, vector<32x64xf32>
    %cst_84 = arith.constant dense<0.000000e+00> : vector<8x64xf32>
    %164 = tpu.matmul %162, %163, %cst_84 {dimension_numbers = #tpu.dot_dimension_numbers<[1], [0], [0], [1], [0, 0, 1, 1], [], []>} : vector<8x32xf32>, vector<32x64xf32>, vector<8x64xf32> -> vector<8x64xf32>
    %cst_85 = arith.constant 0.000000e+00 : f32
    %165 = vector.broadcast %cst_85 : f32 to vector<8x64xf32>
    %166 = arith.maximumf %164, %165 : vector<8x64xf32>
    %c0_86 = arith.constant 0 : index
    %c0_87 = arith.constant 0 : index
    %167 = vector.load %arg9[%c0_86, %c0_87] : memref<64x32xf32, #tpu.memory_space<vmem>>, vector<64x32xf32>
    %cst_88 = arith.constant dense<0.000000e+00> : vector<8x32xf32>
    %168 = tpu.matmul %166, %167, %cst_88 {dimension_numbers = #tpu.dot_dimension_numbers<[1], [0], [0], [1], [0, 0, 1, 1], [], []>} : vector<8x64xf32>, vector<64x32xf32>, vector<8x32xf32> -> vector<8x32xf32>
    %169 = arith.addf %168, %162 : vector<8x32xf32>
    %cst_89 = arith.constant dense<0.000000e+00> : vector<8xf32>
    %170 = vector.multi_reduction <add>, %169, %cst_89 [1] : vector<8x32xf32> to vector<8xf32>
    %171 = vector.shape_cast %170 : vector<8xf32> to vector<8x1xf32>
    %cst_90 = arith.constant 3.200000e+01 : f32
    %172 = vector.broadcast %cst_90 : f32 to vector<8x1xf32>
    %173 = arith.divf %171, %172 : vector<8x1xf32>
    %174 = vector.broadcast %173 : vector<8x1xf32> to vector<8x32xf32>
    %175 = arith.subf %169, %174 : vector<8x32xf32>
    %176 = arith.mulf %175, %175 : vector<8x32xf32>
    %cst_91 = arith.constant dense<0.000000e+00> : vector<8xf32>
    %177 = vector.multi_reduction <add>, %176, %cst_91 [1] : vector<8x32xf32> to vector<8xf32>
    %178 = vector.shape_cast %177 : vector<8xf32> to vector<8x1xf32>
    %cst_92 = arith.constant 3.200000e+01 : f32
    %179 = vector.broadcast %cst_92 : f32 to vector<8x1xf32>
    %180 = arith.divf %178, %179 : vector<8x1xf32>
    %181 = vector.broadcast %173 : vector<8x1xf32> to vector<8x32xf32>
    %182 = arith.subf %169, %181 : vector<8x32xf32>
    %cst_93 = arith.constant 9.99999974E-6 : f32
    %183 = vector.broadcast %cst_93 : f32 to vector<8x1xf32>
    %184 = arith.addf %180, %183 : vector<8x1xf32>
    %185 = math.rsqrt %184 : vector<8x1xf32>
    %186 = vector.broadcast %185 : vector<8x1xf32> to vector<8x32xf32>
    %187 = arith.mulf %182, %186 : vector<8x32xf32>
    %c0_94 = arith.constant 0 : index
    %c0_95 = arith.constant 0 : index
    %188 = vector.load %arg12[%c0_94, %c0_95] : memref<1x32xf32, #tpu.memory_space<vmem>>, vector<1x32xf32>
    %189 = vector.shape_cast %188 : vector<1x32xf32> to vector<32xf32>
    %190 = vector.shape_cast %189 : vector<32xf32> to vector<1x32xf32>
    %191 = vector.broadcast %190 : vector<1x32xf32> to vector<8x32xf32>
    %192 = arith.mulf %187, %191 : vector<8x32xf32>
    %c0_96 = arith.constant 0 : index
    %c0_97 = arith.constant 0 : index
    %193 = vector.load %arg13[%c0_96, %c0_97] : memref<1x32xf32, #tpu.memory_space<vmem>>, vector<1x32xf32>
    %194 = vector.shape_cast %193 : vector<1x32xf32> to vector<32xf32>
    %195 = vector.shape_cast %194 : vector<32xf32> to vector<1x32xf32>
    %196 = vector.broadcast %195 : vector<1x32xf32> to vector<8x32xf32>
    %197 = arith.addf %192, %196 : vector<8x32xf32>
    %c0_98 = arith.constant 0 : index
    %c0_99 = arith.constant 0 : index
    %c0_100 = arith.constant 0 : index
    %198 = vector.load %arg14[%c0_98, %c0_99, %c0_100] : memref<1x8x32xf32, #tpu.memory_space<vmem>>, vector<1x8x32xf32>
    %199 = vector.shape_cast %198 : vector<1x8x32xf32> to vector<8x32xf32>
    %200 = vector.shape_cast %197 : vector<8x32xf32> to vector<1x8x32xf32>
    tpu.vector_store %arg14[%c0_98, %c0_99, %c0_100], %200 {strides = array<i32>} : memref<1x8x32xf32, #tpu.memory_space<vmem>>, vector<1x8x32xf32>,
    return
  }
  func.func @transform_0(%arg0: i32, %arg1: i32) -> (i32, i32, i32) {
    %c0_i32 = arith.constant 0 : i32
    %c0_i32_0 = arith.constant 0 : i32
    %c0_i32_1 = arith.constant 0 : i32
    return %arg0, %c0_i32, %c0_i32_0 : i32, i32, i32
  }
  func.func @transform_1(%arg0: i32, %arg1: i32) -> (i32, i32, i32) {
    %c0_i32 = arith.constant 0 : i32
    %c0_i32_0 = arith.constant 0 : i32
    return %arg0, %arg1, %c0_i32 : i32, i32, i32
  }
  func.func @transform_2(%arg0: i32, %arg1: i32) -> (i32, i32, i32) {
    %c0_i32 = arith.constant 0 : i32
    %c0_i32_0 = arith.constant 0 : i32
    %c0_i32_1 = arith.constant 0 : i32
    return %arg0, %c0_i32, %c0_i32_0 : i32, i32, i32
  }
  func.func @transform_3(%arg0: i32, %arg1: i32) -> (i32, i32) {
    %c0_i32 = arith.constant 0 : i32
    %c0_i32_0 = arith.constant 0 : i32
    %c0_i32_1 = arith.constant 0 : i32
    return %c0_i32, %c0_i32_0 : i32, i32
  }
  func.func @transform_4(%arg0: i32, %arg1: i32) -> (i32, i32) {
    %c0_i32 = arith.constant 0 : i32
    %c0_i32_0 = arith.constant 0 : i32
    %c0_i32_1 = arith.constant 0 : i32
    return %c0_i32, %c0_i32_0 : i32, i32
  }
  func.func @transform_5(%arg0: i32, %arg1: i32) -> (i32, i32) {
    %c0_i32 = arith.constant 0 : i32
    %c0_i32_0 = arith.constant 0 : i32
    %c0_i32_1 = arith.constant 0 : i32
    return %c0_i32, %c0_i32_0 : i32, i32
  }
  func.func @transform_6(%arg0: i32, %arg1: i32) -> (i32, i32) {
    %c0_i32 = arith.constant 0 : i32
    %c0_i32_0 = arith.constant 0 : i32
    %c0_i32_1 = arith.constant 0 : i32
    return %c0_i32, %c0_i32_0 : i32, i32
  }
  func.func @transform_7(%arg0: i32, %arg1: i32) -> (i32, i32) {
    %c0_i32 = arith.constant 0 : i32
    %c0_i32_0 = arith.constant 0 : i32
    %c0_i32_1 = arith.constant 0 : i32
    return %c0_i32, %c0_i32_0 : i32, i32
  }
  func.func @transform_8(%arg0: i32, %arg1: i32) -> (i32, i32) {
    %c0_i32 = arith.constant 0 : i32
    %c0_i32_0 = arith.constant 0 : i32
    %c0_i32_1 = arith.constant 0 : i32
    return %c0_i32, %c0_i32_0 : i32, i32
  }
  func.func @transform_9(%arg0: i32, %arg1: i32) -> (i32, i32) {
    %c0_i32 = arith.constant 0 : i32
    %c0_i32_0 = arith.constant 0 : i32
    %c0_i32_1 = arith.constant 0 : i32
    return %c0_i32, %c0_i32_0 : i32, i32
  }
  func.func @transform_10(%arg0: i32, %arg1: i32) -> (i32, i32) {
    %c0_i32 = arith.constant 0 : i32
    %c0_i32_0 = arith.constant 0 : i32
    %c0_i32_1 = arith.constant 0 : i32
    return %c0_i32, %c0_i32_0 : i32, i32
  }
  func.func @transform_11(%arg0: i32, %arg1: i32) -> (i32, i32) {
    %c0_i32 = arith.constant 0 : i32
    %c0_i32_0 = arith.constant 0 : i32
    %c0_i32_1 = arith.constant 0 : i32
    return %c0_i32, %c0_i32_0 : i32, i32
  }
  func.func @transform_12(%arg0: i32, %arg1: i32) -> (i32, i32, i32) {
    %c0_i32 = arith.constant 0 : i32
    %c0_i32_0 = arith.constant 0 : i32
    return %arg0, %arg1, %c0_i32 : i32, i32, i32
  }
  func.func @transform_13(%arg0: i32, %arg1: i32) -> (i32, i32, i32, i32) {
    %c0_i32 = arith.constant 0 : i32
    %c0_i32_0 = arith.constant 0 : i32
    %c0_i32_1 = arith.constant 0 : i32
    return %arg0, %c0_i32, %arg1, %c0_i32_0 : i32, i32, i32, i32
  }
}

</mosaic_0001>

<llo_original>
// kernel: tpu_custom_call.1
$region0: #{tpu_custom_call.1}
  #allocation0 [shape = 'u32[]', space=smem, size = 0x4, offset = 0x4, fixed_abs, tag = 'smem constant byte address 0x4 - core index']
  #allocation1 [shape = 'u32[72,128]{1,0:T(1,128)}', space=vmem, size = 0x9000, scoped, tag = 'internal scratch']
  #allocation2 [shape = 'f32[4,16,16]{2,1,0:T(8,128)}', space=vmem, size = 0x8000, scoped, tag = 'scratch operand']
  #allocation3 [shape = 'f32[4,16,16]{2,1,0:T(8,128)}', space=vmem, size = 0x8000, scoped, tag = 'scratch operand']
  %s0 = inlined_call_operand.vmem [shape: f32[2,16,32], index: 0, kind: input, shape index: {}]
  %s1 = inlined_call_operand.vmem [shape: f32[2,16,32], index: 1, kind: input, shape index: {}]
  %s2 = inlined_call_operand.hbm [shape: f32[2,1,16], index: 2, kind: input, shape index: {}]
  %s3 = inlined_call_operand.vmem [shape: f32[32,64], index: 3, kind: input, shape index: {}]
  %s4 = inlined_call_operand.vmem [shape: f32[32,128], index: 4, kind: input, shape index: {}]
  %s5 = inlined_call_operand.vmem [shape: f32[64,32], index: 5, kind: input, shape index: {}]
  %s6 = inlined_call_operand.vmem [shape: f32[32,64], index: 6, kind: input, shape index: {}]
  %s7 = inlined_call_operand.vmem [shape: f32[64,32], index: 7, kind: input, shape index: {}]
  %s8 = inlined_call_operand.vmem [shape: f32[1,32], index: 8, kind: input, shape index: {}]
  %s9 = inlined_call_operand.vmem [shape: f32[1,32], index: 9, kind: input, shape index: {}]
  %s10 = inlined_call_operand.vmem [shape: f32[1,32], index: 10, kind: input, shape index: {}]
  %s11 = inlined_call_operand.vmem [shape: f32[1,32], index: 11, kind: input, shape index: {}]
  %s12 = inlined_call_operand.hbm [shape: f32[2,16,32], index: 12, kind: output, shape index: {0}]
  %s13 = inlined_call_operand.hbm [shape: f32[2,4,16,16], index: 13, kind: output, shape index: {1}]
  %14 = xla_tuple %s12, %s13
  %s15 = sld [smem:[#allocation0]]
  $region97: #{tpu_custom_call.1} parent=0
    _
  %s17 = ssub.s32 1, %s15
  %s18 = scalar_select 0, %s17, %s15
  $region1: #{tpu_custom_call.1} parent=0
    #allocation4 [shape = 'u8[1024]{0}', space=vmem, size = 0x400, scoped, tag = 'input window, operand 2']
    #allocation5 [shape = 's32[2]{0}', space=sflag, size = 0x8, scoped, tag = 'scoped memory for tpu_custom_call.1']
    #allocation6 [shape = 's32[2]{0}', space=sflag, size = 0x8, scoped, tag = 'scoped memory for tpu_custom_call.1']
    #allocation7 [shape = 'u8[8192]{0}', space=vmem, size = 0x2000, scoped, tag = 'output window, operand 0']
    #allocation8 [shape = 'u8[32768]{0}', space=vmem, size = 0x8000, scoped, tag = 'output window, operand 1']
    #allocation9 [shape = 's32[2]{0}', space=sflag, size = 0x8, scoped, tag = 'scoped memory for tpu_custom_call.1']
    %19 = vsyncpa [#allocation5], 0
    %s20 = scalar_lea.sflag [#allocation5], 1
    %21 = vsyncpa %s20, 0
    %22 = vsyncpa [#allocation6], 0
    %s23 = scalar_lea.sflag [#allocation6], 1
    %24 = vsyncpa %s23, 0
    %25 = vsyncpa [#allocation9], 0
    %s26 = scalar_lea.sflag [#allocation9], 1
    %27 = vsyncpa %s26, 0
    loop: start=0, step=1, limit=6
    $region2: #{tpu_custom_call.1} parent=1 // loop_pre_header
      _
    $region3: #{tpu_custom_call.1} parent=1 // loop_header
      %s29 = sphi 0, %s33
      %p30 = scmp.ge.s32.totalorder %s29, 6
      %s36 = sphi 0, %s48
      %s37 = sphi 0, %s44
      %s38 = sphi 0, %s36
      %s39 = sphi 0, %s37
      %s40 = sphi 0, %s38
      %s41 = sphi 0, %s39
      %s51 = sphi 0, %s53
      %s54 = sphi 0, %s51
      %s55 = sphi 0, %s54
      %s71 = sphi 0, %s55
      %s79 = sphi 0, %s81
      %s82 = sphi 0, %s79
      %s83 = sphi 0, %s82
      %s99 = sphi 0, %s83
      %s105 = sphi 0, %s107
      %s108 = sphi 0, %s105
      %s109 = sphi 0, %s108
      %s125 = sphi 0, %s109
      %s129 = sphi 0, %s129
      %s131 = sphi 0, %s129
      %s132 = sphi 0, %s131
      %s146 = sphi 0, %s132
      %s150 = sphi 0, %s150
      %s152 = sphi 0, %s150
      %s153 = sphi 0, %s152
      %s167 = sphi 0, %s153
      %s171 = sphi 0, %s171
      %s173 = sphi 0, %s171
      %s174 = sphi 0, %s173
      %s188 = sphi 0, %s174
      %s192 = sphi 0, %s192
      %s194 = sphi 0, %s192
      %s195 = sphi 0, %s194
      %s209 = sphi 0, %s195
      %s213 = sphi 0, %s213
      %s215 = sphi 0, %s213
      %s216 = sphi 0, %s215
      %s230 = sphi 0, %s216
      %s234 = sphi 0, %s234
      %s236 = sphi 0, %s234
      %s237 = sphi 0, %s236
      %s251 = sphi 0, %s237
      %s255 = sphi 0, %s255
      %s257 = sphi 0, %s255
      %s258 = sphi 0, %s257
      %s272 = sphi 0, %s258
      %s276 = sphi 0, %s276
      %s278 = sphi 0, %s276
      %s279 = sphi 0, %s278
      %s293 = sphi 0, %s279
      %s297 = sphi 0, %s297
      %s299 = sphi 0, %s297
      %s300 = sphi 0, %s299
      %s314 = sphi 0, %s300
      %s322 = sphi 0, %s324
      %s325 = sphi 0, %s322
      %s326 = sphi 0, %s325
      %s342 = sphi 0, %s326
      %s350 = sphi 0, %s352
      %s353 = sphi 0, %s350
      %s354 = sphi 0, %s353
      %s370 = sphi 0, %s354
    $region4: #{tpu_custom_call.1} parent=1 // loop_header_branch
      %32 = sbr.rel (%p30) target = $region8
    $region5: #{tpu_custom_call.1} parent=1 // loop_body
      %s34 = ssub.s32 %s29, 1
      %s35 = ssub.s32 %s29, 2
      %s42 = sadd.s32 1, %s37
      %p43 = scmp.ge.s32.totalorder %s42, 2
      %s44 = scalar_select %p43, 0, %s42
      %s45 = sadd.s32 1, %s36
      %s46 = scalar_select %p43, %s45, %s36
      %p47 = scmp.ge.s32.totalorder %s46, 2
      %s48 = scalar_select %p47, 0, %s46
      %s49 = ssub.s32 %s36, %s48
      %p50 = scmp.eq.s32.totalorder %s49, 0
      %s52 = sadd.s32 %s51, 1
      %s53 = scalar_select %p50, %s51, %s52
      %p56 = pneg %p50
      %p57 = scmp.eq.s32.totalorder %s29, 3
      %p58 = por %p56, %p57
      %p59 = scmp.ne.s32.totalorder %s51, %s54
      %p60 = scmp.eq.s32.totalorder %s29, 0
      %p61 = por %p59, %p60
      %p62 = scmp.ne.s32.totalorder %s51, %s54
      %p63 = scmp.eq.s32.totalorder %s34, 3
      %p64 = por %p62, %p63
      %p65 = scmp.ne.s32.totalorder %s54, %s55
      %p66 = scmp.eq.s32.totalorder %s34, 0
      %p67 = por %p65, %p66
      %p68 = scmp.ne.s32.totalorder %s54, %s55
      %p69 = scmp.eq.s32.totalorder %s35, 3
      %p70 = por %p68, %p69
      %p72 = scmp.ne.s32.totalorder %s55, %s71
      %p73 = scmp.eq.s32.totalorder %s35, 0
      %p74 = por %p72, %p73
      %s75 = ssub.s32 %s36, %s48
      %s76 = ssub.s32 %s37, %s44
      %s77 = sor.u32 %s75, %s76
      %p78 = scmp.eq.s32.totalorder %s77, 0
      %s80 = sadd.s32 %s79, 1
      %s81 = scalar_select %p78, %s79, %s80
      %p84 = pneg %p78
      %p85 = scmp.eq.s32.totalorder %s29, 3
      %p86 = por %p84, %p85
      %p87 = scmp.ne.s32.totalorder %s79, %s82
      %p88 = scmp.eq.s32.totalorder %s29, 0
      %p89 = por %p87, %p88
      %p90 = scmp.ne.s32.totalorder %s79, %s82
      %p91 = scmp.eq.s32.totalorder %s34, 3
      %p92 = por %p90, %p91
      %p93 = scmp.ne.s32.totalorder %s82, %s83
      %p94 = scmp.eq.s32.totalorder %s34, 0
      %p95 = por %p93, %p94
      %p96 = scmp.ne.s32.totalorder %s82, %s83
      %p97 = scmp.eq.s32.totalorder %s35, 3
      %p98 = por %p96, %p97
      %p100 = scmp.ne.s32.totalorder %s83, %s99
      %p101 = scmp.eq.s32.totalorder %s35, 0
      %p102 = por %p100, %p101
      %s103 = ssub.s32 %s36, %s48
      %p104 = scmp.eq.s32.totalorder %s103, 0
      %s106 = sadd.s32 %s105, 1
      %s107 = scalar_select %p104, %s105, %s106
      %p110 = pneg %p104
      %p111 = scmp.eq.s32.totalorder %s29, 3
      %p112 = por %p110, %p111
      %p113 = scmp.ne.s32.totalorder %s105, %s108
      %p114 = scmp.eq.s32.totalorder %s29, 0
      %p115 = por %p113, %p114
      %p116 = scmp.ne.s32.totalorder %s105, %s108
      %p117 = scmp.eq.s32.totalorder %s34, 3
      %p118 = por %p116, %p117
      %p119 = scmp.ne.s32.totalorder %s108, %s109
      %p120 = scmp.eq.s32.totalorder %s34, 0
      %p121 = por %p119, %p120
      %p122 = scmp.ne.s32.totalorder %s108, %s109
      %p123 = scmp.eq.s32.totalorder %s35, 3
      %p124 = por %p122, %p123
      %p126 = scmp.ne.s32.totalorder %s109, %s125
      %p127 = scmp.eq.s32.totalorder %s35, 0
      %p128 = por %p126, %p127
      %s130 = sadd.s32 %s129, 1
      %p133 = scmp.eq.s32.totalorder %s29, 3
      %p134 = scmp.ne.s32.totalorder %s129, %s131
      %p135 = scmp.eq.s32.totalorder %s29, 0
      %p136 = por %p134, %p135
      %p137 = scmp.ne.s32.totalorder %s129, %s131
      %p138 = scmp.eq.s32.totalorder %s34, 3
      %p139 = por %p137, %p138
      %p140 = scmp.ne.s32.totalorder %s131, %s132
      %p141 = scmp.eq.s32.totalorder %s34, 0
      %p142 = por %p140, %p141
      %p143 = scmp.ne.s32.totalorder %s131, %s132
      %p144 = scmp.eq.s32.totalorder %s35, 3
      %p145 = por %p143, %p144
      %p147 = scmp.ne.s32.totalorder %s132, %s146
      %p148 = scmp.eq.s32.totalorder %s35, 0
      %p149 = por %p147, %p148
      %s151 = sadd.s32 %s150, 1
      %p154 = scmp.eq.s32.totalorder %s29, 3
      %p155 = scmp.ne.s32.totalorder %s150, %s152
      %p156 = scmp.eq.s32.totalorder %s29, 0
      %p157 = por %p155, %p156
      %p158 = scmp.ne.s32.totalorder %s150, %s152
      %p159 = scmp.eq.s32.totalorder %s34, 3
      %p160 = por %p158, %p159
      %p161 = scmp.ne.s32.totalorder %s152, %s153
      %p162 = scmp.eq.s32.totalorder %s34, 0
      %p163 = por %p161, %p162
      %p164 = scmp.ne.s32.totalorder %s152, %s153
      %p165 = scmp.eq.s32.totalorder %s35, 3
      %p166 = por %p164, %p165
      %p168 = scmp.ne.s32.totalorder %s153, %s167
      %p169 = scmp.eq.s32.totalorder %s35, 0
      %p170 = por %p168, %p169
      %s172 = sadd.s32 %s171, 1
      %p175 = scmp.eq.s32.totalorder %s29, 3
      %p176 = scmp.ne.s32.totalorder %s171, %s173
      %p177 = scmp.eq.s32.totalorder %s29, 0
      %p178 = por %p176, %p177
      %p179 = scmp.ne.s32.totalorder %s171, %s173
      %p180 = scmp.eq.s32.totalorder %s34, 3
      %p181 = por %p179, %p180
      %p182 = scmp.ne.s32.totalorder %s173, %s174
      %p183 = scmp.eq.s32.totalorder %s34, 0
      %p184 = por %p182, %p183
      %p185 = scmp.ne.s32.totalorder %s173, %s174
      %p186 = scmp.eq.s32.totalorder %s35, 3
      %p187 = por %p185, %p186
      %p189 = scmp.ne.s32.totalorder %s174, %s188
      %p190 = scmp.eq.s32.totalorder %s35, 0
      %p191 = por %p189, %p190
      %s193 = sadd.s32 %s192, 1
      %p196 = scmp.eq.s32.totalorder %s29, 3
      %p197 = scmp.ne.s32.totalorder %s192, %s194
      %p198 = scmp.eq.s32.totalorder %s29, 0
      %p199 = por %p197, %p198
      %p200 = scmp.ne.s32.totalorder %s192, %s194
      %p201 = scmp.eq.s32.totalorder %s34, 3
      %p202 = por %p200, %p201
      %p203 = scmp.ne.s32.totalorder %s194, %s195
      %p204 = scmp.eq.s32.totalorder %s34, 0
      %p205 = por %p203, %p204
      %p206 = scmp.ne.s32.totalorder %s194, %s195
      %p207 = scmp.eq.s32.totalorder %s35, 3
      %p208 = por %p206, %p207
      %p210 = scmp.ne.s32.totalorder %s195, %s209
      %p211 = scmp.eq.s32.totalorder %s35, 0
      %p212 = por %p210, %p211
      %s214 = sadd.s32 %s213, 1
      %p217 = scmp.eq.s32.totalorder %s29, 3
      %p218 = scmp.ne.s32.totalorder %s213, %s215
      %p219 = scmp.eq.s32.totalorder %s29, 0
      %p220 = por %p218, %p219
      %p221 = scmp.ne.s32.totalorder %s213, %s215
      %p222 = scmp.eq.s32.totalorder %s34, 3
      %p223 = por %p221, %p222
      %p224 = scmp.ne.s32.totalorder %s215, %s216
      %p225 = scmp.eq.s32.totalorder %s34, 0
      %p226 = por %p224, %p225
      %p227 = scmp.ne.s32.totalorder %s215, %s216
      %p228 = scmp.eq.s32.totalorder %s35, 3
      %p229 = por %p227, %p228
      %p231 = scmp.ne.s32.totalorder %s216, %s230
      %p232 = scmp.eq.s32.totalorder %s35, 0
      %p233 = por %p231, %p232
      %s235 = sadd.s32 %s234, 1
      %p238 = scmp.eq.s32.totalorder %s29, 3
      %p239 = scmp.ne.s32.totalorder %s234, %s236
      %p240 = scmp.eq.s32.totalorder %s29, 0
      %p241 = por %p239, %p240
      %p242 = scmp.ne.s32.totalorder %s234, %s236
      %p243 = scmp.eq.s32.totalorder %s34, 3
      %p244 = por %p242, %p243
      %p245 = scmp.ne.s32.totalorder %s236, %s237
      %p246 = scmp.eq.s32.totalorder %s34, 0
      %p247 = por %p245, %p246
      %p248 = scmp.ne.s32.totalorder %s236, %s237
      %p249 = scmp.eq.s32.totalorder %s35, 3
      %p250 = por %p248, %p249
      %p252 = scmp.ne.s32.totalorder %s237, %s251
      %p253 = scmp.eq.s32.totalorder %s35, 0
      %p254 = por %p252, %p253
      %s256 = sadd.s32 %s255, 1
      %p259 = scmp.eq.s32.totalorder %s29, 3
      %p260 = scmp.ne.s32.totalorder %s255, %s257
      %p261 = scmp.eq.s32.totalorder %s29, 0
      %p262 = por %p260, %p261
      %p263 = scmp.ne.s32.totalorder %s255, %s257
      %p264 = scmp.eq.s32.totalorder %s34, 3
      %p265 = por %p263, %p264
      %p266 = scmp.ne.s32.totalorder %s257, %s258
      %p267 = scmp.eq.s32.totalorder %s34, 0
      %p268 = por %p266, %p267
      %p269 = scmp.ne.s32.totalorder %s257, %s258
      %p270 = scmp.eq.s32.totalorder %s35, 3
      %p271 = por %p269, %p270
      %p273 = scmp.ne.s32.totalorder %s258, %s272
      %p274 = scmp.eq.s32.totalorder %s35, 0
      %p275 = por %p273, %p274
      %s277 = sadd.s32 %s276, 1
      %p280 = scmp.eq.s32.totalorder %s29, 3
      %p281 = scmp.ne.s32.totalorder %s276, %s278
      %p282 = scmp.eq.s32.totalorder %s29, 0
      %p283 = por %p281, %p282
      %p284 = scmp.ne.s32.totalorder %s276, %s278
      %p285 = scmp.eq.s32.totalorder %s34, 3
      %p286 = por %p284, %p285
      %p287 = scmp.ne.s32.totalorder %s278, %s279
      %p288 = scmp.eq.s32.totalorder %s34, 0
      %p289 = por %p287, %p288
      %p290 = scmp.ne.s32.totalorder %s278, %s279
      %p291 = scmp.eq.s32.totalorder %s35, 3
      %p292 = por %p290, %p291
      %p294 = scmp.ne.s32.totalorder %s279, %s293
      %p295 = scmp.eq.s32.totalorder %s35, 0
      %p296 = por %p294, %p295
      %s298 = sadd.s32 %s297, 1
      %p301 = scmp.eq.s32.totalorder %s29, 3
      %p302 = scmp.ne.s32.totalorder %s297, %s299
      %p303 = scmp.eq.s32.totalorder %s29, 0
      %p304 = por %p302, %p303
      %p305 = scmp.ne.s32.totalorder %s297, %s299
      %p306 = scmp.eq.s32.totalorder %s34, 3
      %p307 = por %p305, %p306
      %p308 = scmp.ne.s32.totalorder %s299, %s300
      %p309 = scmp.eq.s32.totalorder %s34, 0
      %p310 = por %p308, %p309
      %p311 = scmp.ne.s32.totalorder %s299, %s300
      %p312 = scmp.eq.s32.totalorder %s35, 3
      %p313 = por %p311, %p312
      %p315 = scmp.ne.s32.totalorder %s300, %s314
      %p316 = scmp.eq.s32.totalorder %s35, 0
      %p317 = por %p315, %p316
      %s318 = ssub.s32 %s36, %s48
      %s319 = ssub.s32 %s37, %s44
      %s320 = sor.u32 %s318, %s319
      %p321 = scmp.eq.s32.totalorder %s320, 0
      %s323 = sadd.s32 %s322, 1
      %s324 = scalar_select %p321, %s322, %s323
      %p327 = pneg %p321
      %p328 = scmp.eq.s32.totalorder %s29, 3
      %p329 = por %p327, %p328
      %p330 = scmp.ne.s32.totalorder %s322, %s325
      %p331 = scmp.eq.s32.totalorder %s29, 0
      %p332 = por %p330, %p331
      %p333 = scmp.ne.s32.totalorder %s322, %s325
      %p334 = scmp.eq.s32.totalorder %s34, 3
      %p335 = por %p333, %p334
      %p336 = scmp.ne.s32.totalorder %s325, %s326
      %p337 = scmp.eq.s32.totalorder %s34, 0
      %p338 = por %p336, %p337
      %p339 = scmp.ne.s32.totalorder %s325, %s326
      %p340 = scmp.eq.s32.totalorder %s35, 3
      %p341 = por %p339, %p340
      %p343 = scmp.ne.s32.totalorder %s326, %s342
      %p344 = scmp.eq.s32.totalorder %s35, 0
      %p345 = por %p343, %p344
      %s346 = ssub.s32 %s36, %s48
      %s347 = ssub.s32 %s37, %s44
      %s348 = sor.u32 %s346, %s347
      %p349 = scmp.eq.s32.totalorder %s348, 0
      %s351 = sadd.s32 %s350, 1
      %s352 = scalar_select %p349, %s350, %s351
      %p355 = pneg %p349
      %p356 = scmp.eq.s32.totalorder %s29, 3
      %p357 = por %p355, %p356
      %p358 = scmp.ne.s32.totalorder %s350, %s353
      %p359 = scmp.eq.s32.totalorder %s29, 0
      %p360 = por %p358, %p359
      %p361 = scmp.ne.s32.totalorder %s350, %s353
      %p362 = scmp.eq.s32.totalorder %s34, 3
      %p363 = por %p361, %p362
      %p364 = scmp.ne.s32.totalorder %s353, %s354
      %p365 = scmp.eq.s32.totalorder %s34, 0
      %p366 = por %p364, %p365
      %p367 = scmp.ne.s32.totalorder %s353, %s354
      %p368 = scmp.eq.s32.totalorder %s35, 3
      %p369 = por %p367, %p368
      %p371 = scmp.ne.s32.totalorder %s354, %s370
      %p372 = scmp.eq.s32.totalorder %s35, 0
      %p373 = por %p371, %p372
      %p374 = scmp.le.s32.totalorder 1, %s29
      %p375 = scmp.lt.s32.totalorder %s29, 5
      %p376 = pnand %p374, %p375
      %p377 = pneg %p376
      // Predicated region
      $region9: #{tpu_custom_call.1} parent=5 // pred_check
        _
      $region10: #{tpu_custom_call.1} parent=5 // pred_check_branch
        %379 = sbr.rel (%p376) target = $region12
      $region11: #{tpu_custom_call.1} parent=5 // pred_region
        %s380 = ssub.s32 %s29, 1
        // Predicated region
        $region13: #{tpu_custom_call.1} parent=11 // pred_check
          %p381 = pneg %p142
        $region14: #{tpu_custom_call.1} parent=11 // pred_check_branch
          %383 = sbr.rel (%p381) target = $region16
        $region15: #{tpu_custom_call.1} parent=11 // pred_region
          _
        $region16: #{tpu_custom_call.1} parent=11 // pred_fallthru
          _
        // Predicated region
        $region17: #{tpu_custom_call.1} parent=11 // pred_check
          %p384 = pneg %p163
        $region18: #{tpu_custom_call.1} parent=11 // pred_check_branch
          %386 = sbr.rel (%p384) target = $region20
        $region19: #{tpu_custom_call.1} parent=11 // pred_region
          _
        $region20: #{tpu_custom_call.1} parent=11 // pred_fallthru
          _
        // Predicated region
        $region21: #{tpu_custom_call.1} parent=11 // pred_check
          %p387 = pneg %p184
        $region22: #{tpu_custom_call.1} parent=11 // pred_check_branch
          %389 = sbr.rel (%p387) target = $region24
        $region23: #{tpu_custom_call.1} parent=11 // pred_region
          _
        $region24: #{tpu_custom_call.1} parent=11 // pred_fallthru
          _
        // Predicated region
        $region25: #{tpu_custom_call.1} parent=11 // pred_check
          %p390 = pneg %p205
        $region26: #{tpu_custom_call.1} parent=11 // pred_check_branch
          %392 = sbr.rel (%p390) target = $region28
        $region27: #{tpu_custom_call.1} parent=11 // pred_region
          _
        $region28: #{tpu_custom_call.1} parent=11 // pred_fallthru
          _
        // Predicated region
        $region29: #{tpu_custom_call.1} parent=11 // pred_check
          %p393 = pneg %p226
        $region30: #{tpu_custom_call.1} parent=11 // pred_check_branch
          %395 = sbr.rel (%p393) target = $region32
        $region31: #{tpu_custom_call.1} parent=11 // pred_region
          _
        $region32: #{tpu_custom_call.1} parent=11 // pred_fallthru
          _
        // Predicated region
        $region33: #{tpu_custom_call.1} parent=11 // pred_check
          %p396 = pneg %p247
        $region34: #{tpu_custom_call.1} parent=11 // pred_check_branch
          %398 = sbr.rel (%p396) target = $region36
        $region35: #{tpu_custom_call.1} parent=11 // pred_region
          _
        $region36: #{tpu_custom_call.1} parent=11 // pred_fallthru
          _
        // Predicated region
        $region37: #{tpu_custom_call.1} parent=11 // pred_check
          %p399 = pneg %p268
        $region38: #{tpu_custom_call.1} parent=11 // pred_check_branch
          %401 = sbr.rel (%p399) target = $region40
        $region39: #{tpu_custom_call.1} parent=11 // pred_region
          _
        $region40: #{tpu_custom_call.1} parent=11 // pred_fallthru
          _
        // Predicated region
        $region41: #{tpu_custom_call.1} parent=11 // pred_check
          %p402 = pneg %p289
        $region42: #{tpu_custom_call.1} parent=11 // pred_check_branch
          %404 = sbr.rel (%p402) target = $region44
        $region43: #{tpu_custom_call.1} parent=11 // pred_region
          _
        $region44: #{tpu_custom_call.1} parent=11 // pred_fallthru
          _
        // Predicated region
        $region45: #{tpu_custom_call.1} parent=11 // pred_check
          %p405 = pneg %p310
        $region46: #{tpu_custom_call.1} parent=11 // pred_check_branch
          %407 = sbr.rel (%p405) target = $region48
        $region47: #{tpu_custom_call.1} parent=11 // pred_region
          _
        $region48: #{tpu_custom_call.1} parent=11 // pred_fallthru
          _
      $region12: #{tpu_custom_call.1} parent=5 // pred_fallthru
        _
      %p408 = scmp.lt.s32.totalorder %s29, 4
      // Predicated region
      $region49: #{tpu_custom_call.1} parent=5 // pred_check
        %p409 = pneg %p408
      $region50: #{tpu_custom_call.1} parent=5 // pred_check_branch
        %411 = sbr.rel (%p409) target = $region52
      $region51: #{tpu_custom_call.1} parent=5 // pred_region
        // Predicated region
        $region53: #{tpu_custom_call.1} parent=51 // pred_check
          %p412 = pneg %p61
        $region54: #{tpu_custom_call.1} parent=51 // pred_check_branch
          %414 = sbr.rel (%p412) target = $region56
        $region55: #{tpu_custom_call.1} parent=51 // pred_region
          %p415 = scmp.lt.s32.totalorder %s36, 1
          %s416 = scalar_select %p415, %s36, 1
          %s417 = smul.addr %s416, 2
          %s418 = smul.addr %s417, 8
          %s419 = scalar_lea.vmem %s0, %s418
        $region56: #{tpu_custom_call.1} parent=51 // pred_fallthru
          _
        // Predicated region
        $region57: #{tpu_custom_call.1} parent=51 // pred_check
          %p420 = pneg %p89
        $region58: #{tpu_custom_call.1} parent=51 // pred_check_branch
          %422 = sbr.rel (%p420) target = $region60
        $region59: #{tpu_custom_call.1} parent=51 // pred_region
          %p423 = scmp.lt.s32.totalorder %s36, 1
          %s424 = scalar_select %p423, %s36, 1
          %p425 = scmp.lt.s32.totalorder %s37, 1
          %s426 = scalar_select %p425, %s37, 1
          %s427 = smul.addr %s424, 2
          %s428 = sadd.s32 %s426, %s427
          %s429 = smul.addr %s428, 8
          %s430 = scalar_lea.vmem %s1, %s429
        $region60: #{tpu_custom_call.1} parent=51 // pred_fallthru
          _
        // Predicated region
        $region61: #{tpu_custom_call.1} parent=51 // pred_check
          %p431 = pneg %p115
        $region62: #{tpu_custom_call.1} parent=51 // pred_check_branch
          %433 = sbr.rel (%p431) target = $region64
        $region63: #{tpu_custom_call.1} parent=51 // pred_region
          %s434 = sand.u32 %s105, 1
          %s435 = scalar_lea.sflag [#allocation5], %s434
          %s436 = sand.u32 %s105, 1
          %s437 = scalar_lea.vmem [#allocation4], %s436
          %439 = vsyncadd %s435, 0
          %s440 = scalar_lea.hbm %s2, %s36
          %s442 = sshll.u32 %s440, 4
          %s443 = int_to_ptr.hbm [resolvable:$true] %s442
          %s444 = sshll.u32 %s437, 4
          %s445 = int_to_ptr.vmem [resolvable:$true] %s444
          %447 = dma.hbm_to_vmem [thread:$0]  %s443, 16, %s445, %s435
        $region64: #{tpu_custom_call.1} parent=51 // pred_fallthru
          _
      $region52: #{tpu_custom_call.1} parent=5 // pred_fallthru
        _
      %p448 = scmp.le.s32.totalorder 1, %s29
      %p449 = scmp.lt.s32.totalorder %s29, 5
      %p450 = pnand %p448, %p449
      %p451 = pneg %p450
      // Predicated region
      $region65: #{tpu_custom_call.1} parent=5 // pred_check
        _
      $region66: #{tpu_custom_call.1} parent=5 // pred_check_branch
        %453 = sbr.rel (%p450) target = $region68
      $region67: #{tpu_custom_call.1} parent=5 // pred_region
        %s454 = ssub.s32 %s29, 1
        %s455 = sand.u32 %s108, 1
        %s456 = scalar_lea.sflag [#allocation5], %s455
        %s457 = sand.u32 %s108, 1
        %s458 = scalar_lea.vmem [#allocation4], %s457
        // Predicated region
        $region69: #{tpu_custom_call.1} parent=67 // pred_check
          %p459 = pneg %p121
        $region70: #{tpu_custom_call.1} parent=67 // pred_check_branch
          %461 = sbr.rel (%p459) target = $region72
        $region71: #{tpu_custom_call.1} parent=67 // pred_region
          %463 = dma.done %s456, 16
        $region72: #{tpu_custom_call.1} parent=67 // pred_fallthru
          _
        %p464 = scmp.lt.s32.totalorder %s38, 1
        %s465 = scalar_select %p464, %s38, 1
        %s466 = smul.addr %s465, 2
        %s467 = smul.addr %s466, 8
        %s468 = scalar_lea.vmem %s0, %s467
        %p469 = pneg %p67
        %p470 = pneg %p64
        %p471 = scmp.lt.s32.totalorder %s38, 1
        %s472 = scalar_select %p471, %s38, 1
        %p473 = scmp.lt.s32.totalorder %s39, 1
        %s474 = scalar_select %p473, %s39, 1
        %s475 = smul.addr %s472, 2
        %s476 = sadd.s32 %s474, %s475
        %s477 = smul.addr %s476, 8
        %s478 = scalar_lea.vmem %s1, %s477
        %p479 = pneg %p95
        %p480 = pneg %p92
        %s481 = sand.u32 %s108, 1
        %s482 = scalar_lea.sflag [#allocation5], %s481
        %s483 = sand.u32 %s108, 1
        %s484 = scalar_lea.vmem [#allocation4], %s483
        %p485 = pneg %p121
        %p486 = pneg %p118
        %p487 = pneg %p142
        %p488 = pneg %p139
        %p489 = pneg %p163
        %p490 = pneg %p160
        %p491 = pneg %p184
        %p492 = pneg %p181
        %p493 = pneg %p205
        %p494 = pneg %p202
        %p495 = pneg %p226
        %p496 = pneg %p223
        %p497 = pneg %p247
        %p498 = pneg %p244
        %p499 = pneg %p268
        %p500 = pneg %p265
        %p501 = pneg %p289
        %p502 = pneg %p286
        %p503 = pneg %p310
        %p504 = pneg %p307
        %p505 = pneg %p338
        %p506 = pneg %p335
        %s507 = sand.u32 %s325, 1
        %s508 = scalar_lea.sflag [#allocation6], %s507
        %s509 = sand.u32 %s325, 1
        %s510 = smul.addr %s509, 8
        %s511 = scalar_lea.vmem [#allocation7], %s510
        %p512 = pneg %p366
        %p513 = pneg %p363
        %s514 = sand.u32 %s353, 1
        %s515 = scalar_lea.sflag [#allocation9], %s514
        %s516 = sand.u32 %s353, 1
        %s517 = smul.addr %s516, 32
        %s518 = scalar_lea.vmem [#allocation8], %s517
        %p519 = scmp.lt.s32.totalorder %s38, 1
        %s520 = scalar_select %p519, %s38, 1
        %s521 = smul.addr %s520, 2
        %s522 = smul.addr %s521, 8
        %s523 = scalar_lea.vmem %s0, %s522
        %p524 = scmp.lt.s32.totalorder %s38, 1
        %s525 = scalar_select %p524, %s38, 1
        %p526 = scmp.lt.s32.totalorder %s39, 1
        %s527 = scalar_select %p526, %s39, 1
        %s528 = smul.addr %s525, 2
        %s529 = sadd.s32 %s527, %s528
        %s530 = smul.addr %s529, 8
        %s531 = scalar_lea.vmem %s1, %s530
        %p532 = scmp.eq.s32.totalorder %s39, 0
        // Predicated region
        $region73: #{tpu_custom_call.1} parent=67 // pred_check
          %p533 = pneg %p532
        $region74: #{tpu_custom_call.1} parent=67 // pred_check_branch
          %535 = sbr.rel (%p533) target = $region76
        $region75: #{tpu_custom_call.1} parent=67 // pred_region
          %v536 = vld [vmem:[%s523] sm:$0xff]
          %v537 = vld [vmem:[%s523 + $0x8] sm:$0xff]
          %v538 = vld [vmem:[%s4] sm:$0xff]
          %v539 = vld [vmem:[%s4 + $0x8] sm:$0xff]
          %v540 = vld [vmem:[%s4 + $0x10] sm:$0xff]
          %v541 = vld [vmem:[%s4 + $0x18] sm:$0xff]
          %vm542 = vcmask 261120
          %v544 = vsel %vm542, %v536, 0
          %v547 = vsel %vm542, %v537, 0
          %549 = vmatpush.msra.mxu0 0.0
          %550 = vmatpush.msra.mxu0 0.0
          %551 = vmatpush.msra.mxu0 0.0
          %552 = vmatpush.msra.mxu0 0.0
          %553 = vmatpush.msra.mxu0 0.0
          %554 = vmatpush.msra.mxu0 0.0
          %555 = vmatpush.msra.mxu0 0.0
          %556 = vmatpush.msra.mxu0 0.0
          %557 = vmatpush.msra.mxu0 0.0
          %558 = vmatpush.msra.mxu0 0.0
          %559 = vmatpush.msra.mxu0 0.0
          %560 = vmatpush.msra.mxu0 0.0
          %561 = vmatpush.msra.mxu0 %v541
          %562 = vmatpush.msra.mxu0 %v540
          %563 = vmatpush.msra.mxu0 %v539
          %564 = vmatpush.msra.mxu0 %v538
          %565 = vmatmul.f32.gmra.mxu0 %v544
          %v566 = vpop.f32.mrf.mxu0
          %v567 = vadd.f32 0.0, %v566
          %568 = vmatmul.f32.gmra.mxu0 %v547
          %v569 = vpop.f32.mrf.mxu0
          %v570 = vadd.f32 0.0, %v569
          %571 = vdwg.mxu0
          %vm572 = vcmask 130048
          %573 = vst.msk [vmem:[#allocation2] sm:$0xff] %vm572, %v567
          %574 = vst.msk [vmem:[#allocation2 + $0x8] sm:$0xff] %vm572, %v570
          %577 = vrot.lane.b32.xlu0 %v567, 64
          %v578 = vpop.permute.xlu0 %577
          %579 = vrot.lane.b32.xlu0 %v570, 64
          %v580 = vpop.permute.xlu0 %579
          %583 = vst.msk [vmem:[#allocation3] sm:$0xff] %vm572, %v578
          %584 = vst.msk [vmem:[#allocation3 + $0x8] sm:$0xff] %vm572, %v580
          %585 = vrot.lane.b32.xlu0 %v567, 112
          %v586 = vpop.permute.xlu0 %585
          %587 = vrot.lane.b32.xlu0 %v570, 112
          %v588 = vpop.permute.xlu0 %587
          %s591 = scalar_lea.vmem [#allocation2], 16
          %592 = vst.msk [vmem:[%s591] sm:$0xff] %vm572, %v586
          %593 = vst.msk [vmem:[%s591 + $0x8] sm:$0xff] %vm572, %v588
          %594 = vrot.lane.b32.xlu0 %v567, 48
          %v595 = vpop.permute.xlu0 %594
          %596 = vrot.lane.b32.xlu0 %v570, 48
          %v597 = vpop.permute.xlu0 %596
          %s600 = scalar_lea.vmem [#allocation3], 16
          %601 = vst.msk [vmem:[%s600] sm:$0xff] %vm572, %v595
          %602 = vst.msk [vmem:[%s600 + $0x8] sm:$0xff] %vm572, %v597
          %603 = vrot.lane.b32.xlu0 %v567, 96
          %v604 = vpop.permute.xlu0 %603
          %605 = vrot.lane.b32.xlu0 %v570, 96
          %v606 = vpop.permute.xlu0 %605
          %s609 = scalar_lea.vmem [#allocation2], 32
          %610 = vst.msk [vmem:[%s609] sm:$0xff] %vm572, %v604
          %611 = vst.msk [vmem:[%s609 + $0x8] sm:$0xff] %vm572, %v606
          %612 = vrot.lane.b32.xlu0 %v567, 32
          %v613 = vpop.permute.xlu0 %612
          %614 = vrot.lane.b32.xlu0 %v570, 32
          %v615 = vpop.permute.xlu0 %614
          %s618 = scalar_lea.vmem [#allocation3], 32
          %619 = vst.msk [vmem:[%s618] sm:$0xff] %vm572, %v613
          %620 = vst.msk [vmem:[%s618 + $0x8] sm:$0xff] %vm572, %v615
          %621 = vrot.lane.b32.xlu0 %v567, 80
          %v622 = vpop.permute.xlu0 %621
          %623 = vrot.lane.b32.xlu0 %v570, 80
          %v624 = vpop.permute.xlu0 %623
          %s627 = scalar_lea.vmem [#allocation2], 48
          %628 = vst.msk [vmem:[%s627] sm:$0xff] %vm572, %v622
          %629 = vst.msk [vmem:[%s627 + $0x8] sm:$0xff] %vm572, %v624
          %630 = vrot.lane.b32.xlu0 %v567, 16
          %v631 = vpop.permute.xlu0 %630
          %632 = vrot.lane.b32.xlu0 %v570, 16
          %v633 = vpop.permute.xlu0 %632
          %s636 = scalar_lea.vmem [#allocation3], 48
          %637 = vst.msk [vmem:[%s636] sm:$0xff] %vm572, %v631
          %638 = vst.msk [vmem:[%s636 + $0x8] sm:$0xff] %vm572, %v633
        $region76: #{tpu_custom_call.1} parent=67 // pred_fallthru
          _
        %v639 = vld [vmem:[%s531] sm:$0xff]
        %v640 = vld [vmem:[%s3] sm:$0xff]
        %v641 = vld [vmem:[%s3 + $0x8] sm:$0xff]
        %v642 = vld [vmem:[%s3 + $0x10] sm:$0xff]
        %v643 = vld [vmem:[%s3 + $0x18] sm:$0xff]
        %vm644 = vcmask 261120
        %v646 = vsel %vm644, %v639, 0
        %648 = vmatpush.msra.mxu0 0.0
        %649 = vmatpush.msra.mxu0 0.0
        %650 = vmatpush.msra.mxu0 0.0
        %651 = vmatpush.msra.mxu0 0.0
        %652 = vmatpush.msra.mxu0 0.0
        %653 = vmatpush.msra.mxu0 0.0
        %654 = vmatpush.msra.mxu0 0.0
        %655 = vmatpush.msra.mxu0 0.0
        %656 = vmatpush.msra.mxu0 0.0
        %657 = vmatpush.msra.mxu0 0.0
        %658 = vmatpush.msra.mxu0 0.0
        %659 = vmatpush.msra.mxu0 0.0
        %660 = vmatpush.msra.mxu0 %v643
        %661 = vmatpush.msra.mxu0 %v642
        %662 = vmatpush.msra.mxu0 %v641
        %663 = vmatpush.msra.mxu0 %v640
        %664 = vmatmul.f32.gmra.mxu0 %v646
        %v665 = vpop.f32.mrf.mxu0
        %v666 = vadd.f32 0.0, %v665
        %667 = vdwg.mxu0
        %s668 = smul.u32 %s39, 8
        %v669 = vlaneseq
        %v670 = vshrl.u32 %v669, 7
        %v671 = vstv %s668
        %v672 = vadd.s32 %v670, %v671
        %v673 = vlaneseq
        %v674 = vand.u32 %v673, 127
        %vm675 = vcmp.gt.s32.totalorder %v674, %v672
        %v676 = vld [vmem:[%s458] sm:$0x1]
        %vm677 = vcmp.gt.f32.partialorder %v676, 0.0
        %v678 = vsel %vm677, 1, 0
        %v679 = vperm.slane %v678, 0
        %vm680 = vcmp.eq.s32.totalorder %v679, 1
        %vm681 = vmor %vm675, %vm680
        %v682 = vld [vmem:[#allocation2] sm:$0xff]
        %v683 = vld [vmem:[#allocation2 + $0x8] sm:$0xff]
        %vm684 = vcmask 130048
        %v686 = vsel %vm684, %v666, 0
        %v689 = vsel %vm684, %v682, 0
        %v692 = vsel %vm684, %v683, 0
        %694 = vmatpush.xpose.msra.mxu0 0.0
        %695 = vmatpush.xpose.msra.mxu0 0.0
        %696 = vmatpush.xpose.msra.mxu0 0.0
        %697 = vmatpush.xpose.msra.mxu0 0.0
        %698 = vmatpush.xpose.msra.mxu0 0.0
        %699 = vmatpush.xpose.msra.mxu0 0.0
        %700 = vmatpush.xpose.msra.mxu0 0.0
        %701 = vmatpush.xpose.msra.mxu0 0.0
        %702 = vmatpush.xpose.msra.mxu0 0.0
        %703 = vmatpush.xpose.msra.mxu0 0.0
        %704 = vmatpush.xpose.msra.mxu0 0.0
        %705 = vmatpush.xpose.msra.mxu0 0.0
        %706 = vmatpush.xpose.msra.mxu0 0.0
        %707 = vmatpush.xpose.msra.mxu0 0.0
        %708 = vmatpush.xpose.msra.mxu0 %v692
        %709 = vmatpush.xpose.msra.mxu0 %v689
        %710 = vmatmul.f32.gmra.mxu0 %v686
        %v711 = vpop.f32.mrf.mxu0
        %v712 = vadd.f32 0.0, %v711
        %713 = vdwg.mxu0
        %v714 = vsel %vm681, -1e+09, %v712
        %v715 = vsel %vm684, %v714, -inf
        %716 = vmax.xlane.f32.xlu0 %v715
        %v717 = vpop.xlane.xlu0 %716
        %v718 = vsub.f32 %v714, %v717
        %v719 = vmul.f32 %v718, 1.442695
        %v720 = vpow.pop %v719
        %v721 = vsel %vm684, %v720, 0.0
        %722 = vadd.xlane.f32.xlu0 %v721
        %v723 = vpop.xlane.xlu0 %722
        %v724 = vrcp.pop %v723
        %v725 = vmul.f32 %v723, %v724
        %v726 = vsub.f32 2.0, %v725
        %v727 = vmul.f32 %v724, %v726
        %v728 = vmul.f32 %v720, %v727
        %729 = vst.msk [vmem:[%s518] sm:$0xff] %vm684, %v728
        %v730 = vld [vmem:[#allocation3] sm:$0xff]
        %v731 = vld [vmem:[#allocation3 + $0x8] sm:$0xff]
        %v733 = vsel %vm684, %v720, 0
        %735 = vmatpush.msra.mxu0 0.0
        %736 = vmatpush.msra.mxu0 0.0
        %737 = vmatpush.msra.mxu0 0.0
        %738 = vmatpush.msra.mxu0 0.0
        %739 = vmatpush.msra.mxu0 0.0
        %740 = vmatpush.msra.mxu0 0.0
        %741 = vmatpush.msra.mxu0 0.0
        %742 = vmatpush.msra.mxu0 0.0
        %743 = vmatpush.msra.mxu0 0.0
        %744 = vmatpush.msra.mxu0 0.0
        %745 = vmatpush.msra.mxu0 0.0
        %746 = vmatpush.msra.mxu0 0.0
        %747 = vmatpush.msra.mxu0 0.0
        %748 = vmatpush.msra.mxu0 0.0
        %749 = vmatpush.msra.mxu0 %v731
        %750 = vmatpush.msra.mxu0 %v730
        %751 = vmatmul.f32.gmra.mxu0 %v733
        %v752 = vpop.f32.mrf.mxu0
        %v753 = vadd.f32 0.0, %v752
        %754 = vdwg.mxu0
        %v755 = vmul.f32 %v753, %v727
        %s756 = scalar_lea.vmem [#allocation2], 16
        %v757 = vld [vmem:[%s756] sm:$0xff]
        %v758 = vld [vmem:[%s756 + $0x8] sm:$0xff]
        %759 = vrot.lane.b32.xlu0 %v666, 112
        %v760 = vpop.permute.xlu0 %759
        %v761 = vsel %vm684, %v760, 0
        %v764 = vsel %vm684, %v757, 0
        %v767 = vsel %vm684, %v758, 0
        %769 = vmatpush.xpose.msra.mxu0 0.0
        %770 = vmatpush.xpose.msra.mxu0 0.0
        %771 = vmatpush.xpose.msra.mxu0 0.0
        %772 = vmatpush.xpose.msra.mxu0 0.0
        %773 = vmatpush.xpose.msra.mxu0 0.0
        %774 = vmatpush.xpose.msra.mxu0 0.0
        %775 = vmatpush.xpose.msra.mxu0 0.0
        %776 = vmatpush.xpose.msra.mxu0 0.0
        %777 = vmatpush.xpose.msra.mxu0 0.0
        %778 = vmatpush.xpose.msra.mxu0 0.0
        %779 = vmatpush.xpose.msra.mxu0 0.0
        %780 = vmatpush.xpose.msra.mxu0 0.0
        %781 = vmatpush.xpose.msra.mxu0 0.0
        %782 = vmatpush.xpose.msra.mxu0 0.0
        %783 = vmatpush.xpose.msra.mxu0 %v767
        %784 = vmatpush.xpose.msra.mxu0 %v764
        %785 = vmatmul.f32.gmra.mxu0 %v761
        %v786 = vpop.f32.mrf.mxu0
        %v787 = vadd.f32 0.0, %v786
        %788 = vdwg.mxu0
        %v789 = vsel %vm681, -1e+09, %v787
        %v790 = vsel %vm684, %v789, -inf
        %791 = vmax.xlane.f32.xlu0 %v790
        %v792 = vpop.xlane.xlu0 %791
        %v793 = vsub.f32 %v789, %v792
        %v794 = vmul.f32 %v793, 1.442695
        %v795 = vpow.pop %v794
        %v796 = vsel %vm684, %v795, 0.0
        %797 = vadd.xlane.f32.xlu0 %v796
        %v798 = vpop.xlane.xlu0 %797
        %v799 = vrcp.pop %v798
        %v800 = vmul.f32 %v798, %v799
        %v801 = vsub.f32 2.0, %v800
        %v802 = vmul.f32 %v799, %v801
        %v803 = vmul.f32 %v795, %v802
        %s804 = scalar_lea.vmem %s518, 8 [#allocation8]
        %805 = vst.msk [vmem:[%s804] sm:$0xff] %vm684, %v803
        %s806 = scalar_lea.vmem [#allocation3], 16
        %v807 = vld [vmem:[%s806] sm:$0xff]
        %v808 = vld [vmem:[%s806 + $0x8] sm:$0xff]
        %v810 = vsel %vm684, %v795, 0
        %812 = vmatpush.msra.mxu0 0.0
        %813 = vmatpush.msra.mxu0 0.0
        %814 = vmatpush.msra.mxu0 0.0
        %815 = vmatpush.msra.mxu0 0.0
        %816 = vmatpush.msra.mxu0 0.0
        %817 = vmatpush.msra.mxu0 0.0
        %818 = vmatpush.msra.mxu0 0.0
        %819 = vmatpush.msra.mxu0 0.0
        %820 = vmatpush.msra.mxu0 0.0
        %821 = vmatpush.msra.mxu0 0.0
        %822 = vmatpush.msra.mxu0 0.0
        %823 = vmatpush.msra.mxu0 0.0
        %824 = vmatpush.msra.mxu0 0.0
        %825 = vmatpush.msra.mxu0 0.0
        %826 = vmatpush.msra.mxu0 %v808
        %827 = vmatpush.msra.mxu0 %v807
        %828 = vmatmul.f32.gmra.mxu0 %v810
        %v829 = vpop.f32.mrf.mxu0
        %v830 = vadd.f32 0.0, %v829
        %831 = vdwg.mxu0
        %v832 = vmul.f32 %v830, %v802
        %s833 = scalar_lea.vmem [#allocation2], 32
        %v834 = vld [vmem:[%s833] sm:$0xff]
        %v835 = vld [vmem:[%s833 + $0x8] sm:$0xff]
        %836 = vrot.lane.b32.xlu0 %v666, 96
        %v837 = vpop.permute.xlu0 %836
        %v838 = vsel %vm684, %v837, 0
        %v841 = vsel %vm684, %v834, 0
        %v844 = vsel %vm684, %v835, 0
        %846 = vmatpush.xpose.msra.mxu0 0.0
        %847 = vmatpush.xpose.msra.mxu0 0.0
        %848 = vmatpush.xpose.msra.mxu0 0.0
        %849 = vmatpush.xpose.msra.mxu0 0.0
        %850 = vmatpush.xpose.msra.mxu0 0.0
        %851 = vmatpush.xpose.msra.mxu0 0.0
        %852 = vmatpush.xpose.msra.mxu0 0.0
        %853 = vmatpush.xpose.msra.mxu0 0.0
        %854 = vmatpush.xpose.msra.mxu0 0.0
        %855 = vmatpush.xpose.msra.mxu0 0.0
        %856 = vmatpush.xpose.msra.mxu0 0.0
        %857 = vmatpush.xpose.msra.mxu0 0.0
        %858 = vmatpush.xpose.msra.mxu0 0.0
        %859 = vmatpush.xpose.msra.mxu0 0.0
        %860 = vmatpush.xpose.msra.mxu0 %v844
        %861 = vmatpush.xpose.msra.mxu0 %v841
        %862 = vmatmul.f32.gmra.mxu0 %v838
        %v863 = vpop.f32.mrf.mxu0
        %v864 = vadd.f32 0.0, %v863
        %865 = vdwg.mxu0
        %v866 = vsel %vm681, -1e+09, %v864
        %v867 = vsel %vm684, %v866, -inf
        %868 = vmax.xlane.f32.xlu0 %v867
        %v869 = vpop.xlane.xlu0 %868
        %v870 = vsub.f32 %v866, %v869
        %v871 = vmul.f32 %v870, 1.442695
        %v872 = vpow.pop %v871
        %v873 = vsel %vm684, %v872, 0.0
        %874 = vadd.xlane.f32.xlu0 %v873
        %v875 = vpop.xlane.xlu0 %874
        %v876 = vrcp.pop %v875
        %v877 = vmul.f32 %v875, %v876
        %v878 = vsub.f32 2.0, %v877
        %v879 = vmul.f32 %v876, %v878
        %v880 = vmul.f32 %v872, %v879
        %s881 = scalar_lea.vmem %s518, 16 [#allocation8]
        %882 = vst.msk [vmem:[%s881] sm:$0xff] %vm684, %v880
        %s883 = scalar_lea.vmem [#allocation3], 32
        %v884 = vld [vmem:[%s883] sm:$0xff]
        %v885 = vld [vmem:[%s883 + $0x8] sm:$0xff]
        %v887 = vsel %vm684, %v872, 0
        %889 = vmatpush.msra.mxu0 0.0
        %890 = vmatpush.msra.mxu0 0.0
        %891 = vmatpush.msra.mxu0 0.0
        %892 = vmatpush.msra.mxu0 0.0
        %893 = vmatpush.msra.mxu0 0.0
        %894 = vmatpush.msra.mxu0 0.0
        %895 = vmatpush.msra.mxu0 0.0
        %896 = vmatpush.msra.mxu0 0.0
        %897 = vmatpush.msra.mxu0 0.0
        %898 = vmatpush.msra.mxu0 0.0
        %899 = vmatpush.msra.mxu0 0.0
        %900 = vmatpush.msra.mxu0 0.0
        %901 = vmatpush.msra.mxu0 0.0
        %902 = vmatpush.msra.mxu0 0.0
        %903 = vmatpush.msra.mxu0 %v885
        %904 = vmatpush.msra.mxu0 %v884
        %905 = vmatmul.f32.gmra.mxu0 %v887
        %v906 = vpop.f32.mrf.mxu0
        %v907 = vadd.f32 0.0, %v906
        %908 = vdwg.mxu0
        %v909 = vmul.f32 %v907, %v879
        %s910 = scalar_lea.vmem [#allocation2], 48
        %v911 = vld [vmem:[%s910] sm:$0xff]
        %v912 = vld [vmem:[%s910 + $0x8] sm:$0xff]
        %913 = vrot.lane.b32.xlu0 %v666, 80
        %v914 = vpop.permute.xlu0 %913
        %v915 = vsel %vm684, %v914, 0
        %v918 = vsel %vm684, %v911, 0
        %v921 = vsel %vm684, %v912, 0
        %923 = vmatpush.xpose.msra.mxu0 0.0
        %924 = vmatpush.xpose.msra.mxu0 0.0
        %925 = vmatpush.xpose.msra.mxu0 0.0
        %926 = vmatpush.xpose.msra.mxu0 0.0
        %927 = vmatpush.xpose.msra.mxu0 0.0
        %928 = vmatpush.xpose.msra.mxu0 0.0
        %929 = vmatpush.xpose.msra.mxu0 0.0
        %930 = vmatpush.xpose.msra.mxu0 0.0
        %931 = vmatpush.xpose.msra.mxu0 0.0
        %932 = vmatpush.xpose.msra.mxu0 0.0
        %933 = vmatpush.xpose.msra.mxu0 0.0
        %934 = vmatpush.xpose.msra.mxu0 0.0
        %935 = vmatpush.xpose.msra.mxu0 0.0
        %936 = vmatpush.xpose.msra.mxu0 0.0
        %937 = vmatpush.xpose.msra.mxu0 %v921
        %938 = vmatpush.xpose.msra.mxu0 %v918
        %939 = vmatmul.f32.gmra.mxu0 %v915
        %v940 = vpop.f32.mrf.mxu0
        %v941 = vadd.f32 0.0, %v940
        %942 = vdwg.mxu0
        %v943 = vsel %vm681, -1e+09, %v941
        %v944 = vsel %vm684, %v943, -inf
        %945 = vmax.xlane.f32.xlu0 %v944
        %v946 = vpop.xlane.xlu0 %945
        %v947 = vsub.f32 %v943, %v946
        %v948 = vmul.f32 %v947, 1.442695
        %v949 = vpow.pop %v948
        %v950 = vsel %vm684, %v949, 0.0
        %951 = vadd.xlane.f32.xlu0 %v950
        %v952 = vpop.xlane.xlu0 %951
        %v953 = vrcp.pop %v952
        %v954 = vmul.f32 %v952, %v953
        %v955 = vsub.f32 2.0, %v954
        %v956 = vmul.f32 %v953, %v955
        %v957 = vmul.f32 %v949, %v956
        %s958 = scalar_lea.vmem %s518, 24 [#allocation8]
        %959 = vst.msk [vmem:[%s958] sm:$0xff] %vm684, %v957
        %s960 = scalar_lea.vmem [#allocation3], 48
        %v961 = vld [vmem:[%s960] sm:$0xff]
        %v962 = vld [vmem:[%s960 + $0x8] sm:$0xff]
        %v964 = vsel %vm684, %v949, 0
        %966 = vmatpush.msra.mxu0 0.0
        %967 = vmatpush.msra.mxu0 0.0
        %968 = vmatpush.msra.mxu0 0.0
        %969 = vmatpush.msra.mxu0 0.0
        %970 = vmatpush.msra.mxu0 0.0
        %971 = vmatpush.msra.mxu0 0.0
        %972 = vmatpush.msra.mxu0 0.0
        %973 = vmatpush.msra.mxu0 0.0
        %974 = vmatpush.msra.mxu0 0.0
        %975 = vmatpush.msra.mxu0 0.0
        %976 = vmatpush.msra.mxu0 0.0
        %977 = vmatpush.msra.mxu0 0.0
        %978 = vmatpush.msra.mxu0 0.0
        %979 = vmatpush.msra.mxu0 0.0
        %980 = vmatpush.msra.mxu0 %v962
        %981 = vmatpush.msra.mxu0 %v961
        %982 = vmatmul.f32.gmra.mxu0 %v964
        %v983 = vpop.f32.mrf.mxu0
        %v984 = vadd.f32 0.0, %v983
        %985 = vdwg.mxu0
        %v986 = vmul.f32 %v984, %v956
        %988 = vrot.lane.b32.xlu0 %v832, 16
        %v989 = vpop.permute.xlu0 %988
        %992 = vrot.lane.b32.xlu0 %v909, 32
        %v993 = vpop.permute.xlu0 %992
        %996 = vrot.lane.b32.xlu0 %v986, 48
        %v997 = vpop.permute.xlu0 %996
        %v999 = vsel %vm684, %v755, %v989
        %v1000 = vsel %vm644, %v999, %v993
        %vm1001 = vcmask 392192
        %v1002 = vsel %vm1001, %v1000, %v997
        %v1003 = vld [vmem:[%s5] sm:$0xff]
        %v1004 = vld [vmem:[%s5 + $0x8] sm:$0xff]
        %v1005 = vld [vmem:[%s5 + $0x10] sm:$0xff]
        %v1006 = vld [vmem:[%s5 + $0x18] sm:$0xff]
        %v1007 = vld [vmem:[%s5 + $0x20] sm:$0xff]
        %v1008 = vld [vmem:[%s5 + $0x28] sm:$0xff]
        %v1009 = vld [vmem:[%s5 + $0x30] sm:$0xff]
        %v1010 = vld [vmem:[%s5 + $0x38] sm:$0xff]
        %vm1011 = vcmask 523264
        %v1013 = vsel %vm1011, %v1002, 0
        %1015 = vmatpush.msra.mxu0 0.0
        %1016 = vmatpush.msra.mxu0 0.0
        %1017 = vmatpush.msra.mxu0 0.0
        %1018 = vmatpush.msra.mxu0 0.0
        %1019 = vmatpush.msra.mxu0 0.0
        %1020 = vmatpush.msra.mxu0 0.0
        %1021 = vmatpush.msra.mxu0 0.0
        %1022 = vmatpush.msra.mxu0 0.0
        %1023 = vmatpush.msra.mxu0 %v1010
        %1024 = vmatpush.msra.mxu0 %v1009
        %1025 = vmatpush.msra.mxu0 %v1008
        %1026 = vmatpush.msra.mxu0 %v1007
        %1027 = vmatpush.msra.mxu0 %v1006
        %1028 = vmatpush.msra.mxu0 %v1005
        %1029 = vmatpush.msra.mxu0 %v1004
        %1030 = vmatpush.msra.mxu0 %v1003
        %1031 = vmatmul.f32.gmra.mxu0 %v1013
        %v1032 = vpop.f32.mrf.mxu0
        %v1033 = vadd.f32 %v639, %v1032
        %1034 = vdwg.mxu0
        %v1035 = vsel %vm644, %v1033, 0.0
        %1036 = vadd.xlane.f32.xlu0 %v1035
        %v1037 = vpop.xlane.xlu0 %1036
        %v1038 = vrcp.pop 32.0
        %v1039 = vmul.f32 32.0, %v1038
        %v1040 = vsub.f32 1.0, %v1039
        %v1041 = vmul.f32 %v1038, %v1040
        %v1042 = vadd.f32 %v1038, %v1041
        %vm1043 = vweird.f32 %v1038
        %v1044 = vsel %vm1043, %v1038, %v1042
        %v1045 = vmul.f32 %v1037, %v1044
        %v1046 = vsub.f32 %v1033, %v1045
        %v1047 = vmul.f32 %v1046, %v1046
        %v1048 = vsel %vm644, %v1047, 0.0
        %1049 = vadd.xlane.f32.xlu0 %v1048
        %v1050 = vpop.xlane.xlu0 %1049
        %v1051 = vmul.f32 %v1050, %v1044
        %v1052 = vadd.f32 %v1051, 1e-05
        %v1053 = vrsqrt.pop %v1052
        %v1054 = vmul.f32 %v1053, %v1052
        %v1055 = vmul.f32 %v1054, %v1053
        %v1056 = vmul.f32 0.5, %v1055
        %v1057 = vsub.f32 1.5, %v1056
        %v1058 = vmul.f32 %v1053, %v1057
        %vm1059 = vweird.f32 %v1052
        %vm1060 = vweird.f32 %v1053
        %vm1061 = vmor %vm1059, %vm1060
        %v1062 = vsel %vm1061, %v1053, %v1058
        %v1063 = vmul.f32 %v1046, %v1062
        %v1064 = vld [vmem:[%s8] sm:$0x1]
        %v1066 = vperm.slane %v1064, 0
        %v1068 = vmul.f32 %v1063, %v1066
        %v1069 = vld [vmem:[%s9] sm:$0x1]
        %v1071 = vperm.slane %v1069, 0
        %v1073 = vadd.f32 %v1068, %v1071
        %v1074 = vld [vmem:[%s6] sm:$0xff]
        %v1075 = vld [vmem:[%s6 + $0x8] sm:$0xff]
        %v1076 = vld [vmem:[%s6 + $0x10] sm:$0xff]
        %v1077 = vld [vmem:[%s6 + $0x18] sm:$0xff]
        %v1079 = vsel %vm644, %v1073, 0
        %1081 = vmatpush.msra.mxu0 0.0
        %1082 = vmatpush.msra.mxu0 0.0
        %1083 = vmatpush.msra.mxu0 0.0
        %1084 = vmatpush.msra.mxu0 0.0
        %1085 = vmatpush.msra.mxu0 0.0
        %1086 = vmatpush.msra.mxu0 0.0
        %1087 = vmatpush.msra.mxu0 0.0
        %1088 = vmatpush.msra.mxu0 0.0
        %1089 = vmatpush.msra.mxu0 0.0
        %1090 = vmatpush.msra.mxu0 0.0
        %1091 = vmatpush.msra.mxu0 0.0
        %1092 = vmatpush.msra.mxu0 0.0
        %1093 = vmatpush.msra.mxu0 %v1077
        %1094 = vmatpush.msra.mxu0 %v1076
        %1095 = vmatpush.msra.mxu0 %v1075
        %1096 = vmatpush.msra.mxu0 %v1074
        %1097 = vmatmul.f32.gmra.mxu0 %v1079
        %v1098 = vpop.f32.mrf.mxu0
        %v1099 = vadd.f32 0.0, %v1098
        %1100 = vdwg.mxu0
        %v1101 = vmax.f32 %v1099, 0.0
        %v1102 = vld [vmem:[%s7] sm:$0xff]
        %v1103 = vld [vmem:[%s7 + $0x8] sm:$0xff]
        %v1104 = vld [vmem:[%s7 + $0x10] sm:$0xff]
        %v1105 = vld [vmem:[%s7 + $0x18] sm:$0xff]
        %v1106 = vld [vmem:[%s7 + $0x20] sm:$0xff]
        %v1107 = vld [vmem:[%s7 + $0x28] sm:$0xff]
        %v1108 = vld [vmem:[%s7 + $0x30] sm:$0xff]
        %v1109 = vld [vmem:[%s7 + $0x38] sm:$0xff]
        %v1111 = vsel %vm1011, %v1101, 0
        %1113 = vmatpush.msra.mxu0 0.0
        %1114 = vmatpush.msra.mxu0 0.0
        %1115 = vmatpush.msra.mxu0 0.0
        %1116 = vmatpush.msra.mxu0 0.0
        %1117 = vmatpush.msra.mxu0 0.0
        %1118 = vmatpush.msra.mxu0 0.0
        %1119 = vmatpush.msra.mxu0 0.0
        %1120 = vmatpush.msra.mxu0 0.0
        %1121 = vmatpush.msra.mxu0 %v1109
        %1122 = vmatpush.msra.mxu0 %v1108
        %1123 = vmatpush.msra.mxu0 %v1107
        %1124 = vmatpush.msra.mxu0 %v1106
        %1125 = vmatpush.msra.mxu0 %v1105
        %1126 = vmatpush.msra.mxu0 %v1104
        %1127 = vmatpush.msra.mxu0 %v1103
        %1128 = vmatpush.msra.mxu0 %v1102
        %1129 = vmatmul.f32.gmra.mxu0 %v1111
        %v1130 = vpop.f32.mrf.mxu0
        %v1131 = vadd.f32 %v1073, %v1130
        %1132 = vdwg.mxu0
        %v1133 = vsel %vm644, %v1131, 0.0
        %1134 = vadd.xlane.f32.xlu0 %v1133
        %v1135 = vpop.xlane.xlu0 %1134
        %v1136 = vmul.f32 %v1135, %v1044
        %v1137 = vsub.f32 %v1131, %v1136
        %v1138 = vmul.f32 %v1137, %v1137
        %v1139 = vsel %vm644, %v1138, 0.0
        %1140 = vadd.xlane.f32.xlu0 %v1139
        %v1141 = vpop.xlane.xlu0 %1140
        %v1142 = vmul.f32 %v1141, %v1044
        %v1143 = vadd.f32 %v1142, 1e-05
        %v1144 = vrsqrt.pop %v1143
        %v1145 = vmul.f32 %v1144, %v1143
        %v1146 = vmul.f32 %v1145, %v1144
        %v1147 = vmul.f32 0.5, %v1146
        %v1148 = vsub.f32 1.5, %v1147
        %v1149 = vmul.f32 %v1144, %v1148
        %vm1150 = vweird.f32 %v1143
        %vm1151 = vweird.f32 %v1144
        %vm1152 = vmor %vm1150, %vm1151
        %v1153 = vsel %vm1152, %v1144, %v1149
        %v1154 = vmul.f32 %v1137, %v1153
        %v1155 = vld [vmem:[%s10] sm:$0x1]
        %v1157 = vperm.slane %v1155, 0
        %v1159 = vmul.f32 %v1154, %v1157
        %v1160 = vld [vmem:[%s11] sm:$0x1]
        %v1162 = vperm.slane %v1160, 0
        %v1164 = vadd.f32 %v1159, %v1162
        %1165 = vst.msk [vmem:[%s511] sm:$0xff] %vm644, %v1164
        %s1166 = sand.u32 %s325, 1
        %s1167 = scalar_lea.sflag [#allocation6], %s1166
        %s1168 = sand.u32 %s325, 1
        %s1169 = smul.addr %s1168, 8
        %s1170 = scalar_lea.vmem [#allocation7], %s1169
        %s1171 = sand.u32 %s353, 1
        %s1172 = scalar_lea.sflag [#allocation9], %s1171
        %s1173 = sand.u32 %s353, 1
        %s1174 = smul.addr %s1173, 32
        %s1175 = scalar_lea.vmem [#allocation8], %s1174
        // Predicated region
        $region77: #{tpu_custom_call.1} parent=67 // pred_check
          %p1176 = pneg %p335
        $region78: #{tpu_custom_call.1} parent=67 // pred_check_branch
          %1178 = sbr.rel (%p1176) target = $region80
        $region79: #{tpu_custom_call.1} parent=67 // pred_region
          %1180 = vsyncadd %s1167, 0
          %s1181 = smul.addr %s38, 2
          %s1182 = sadd.s32 %s39, %s1181
          %s1183 = smul.addr %s1182, 8
          %s1184 = scalar_lea.hbm %s12, %s1183
          %s1186 = sshll.u32 %s1170, 4
          %s1187 = int_to_ptr.vmem [resolvable:$true] %s1186
          %s1188 = sshll.u32 %s1184, 4
          %s1189 = int_to_ptr.hbm [resolvable:$true] %s1188
          %1191 = dma.vmem_to_hbm [thread:$0]  %s1187, 128, %s1189, %s1167
        $region80: #{tpu_custom_call.1} parent=67 // pred_fallthru
          _
        // Predicated region
        $region81: #{tpu_custom_call.1} parent=67 // pred_check
          %p1192 = pneg %p363
        $region82: #{tpu_custom_call.1} parent=67 // pred_check_branch
          %1194 = sbr.rel (%p1192) target = $region84
        $region83: #{tpu_custom_call.1} parent=67 // pred_region
          %1196 = vsyncadd %s1172, 0
          %s1197 = smul.addr %s38, 8
          %s1198 = sadd.s32 %s39, %s1197
          %s1199 = smul.addr %s1198, 8
          %s1200 = scalar_lea.hbm %s13, %s1199
          %s1201 = sshll.u32 %s1175, 4
          %s1202 = int_to_ptr.vmem [resolvable:$true] %s1201
          %s1203 = sshll.u32 %s1200, 4
          %s1204 = int_to_ptr.hbm [resolvable:$true] %s1203
          %1209 = dma.vmem_to_hbm [thread:$0]  %s1202, 512, %s1204, %s1172, 128, 256, 8
        $region84: #{tpu_custom_call.1} parent=67 // pred_fallthru
          _
      $region68: #{tpu_custom_call.1} parent=5 // pred_fallthru
        _
      %p1210 = scmp.le.s32.totalorder 2, %s29
      // Predicated region
      $region85: #{tpu_custom_call.1} parent=5 // pred_check
        %p1211 = pneg %p1210
      $region86: #{tpu_custom_call.1} parent=5 // pred_check_branch
        %1213 = sbr.rel (%p1211) target = $region88
      $region87: #{tpu_custom_call.1} parent=5 // pred_region
        %s1214 = ssub.s32 %s29, 2
        // Predicated region
        $region89: #{tpu_custom_call.1} parent=87 // pred_check
          %p1215 = pneg %p341
        $region90: #{tpu_custom_call.1} parent=87 // pred_check_branch
          %1217 = sbr.rel (%p1215) target = $region92
        $region91: #{tpu_custom_call.1} parent=87 // pred_region
          %s1218 = sand.u32 %s326, 1
          %s1219 = scalar_lea.sflag [#allocation6], %s1218
          %s1220 = sand.u32 %s326, 1
          %s1221 = smul.addr %s1220, 8
          %s1222 = scalar_lea.vmem [#allocation7], %s1221
          %1224 = dma.done %s1219, 128
        $region92: #{tpu_custom_call.1} parent=87 // pred_fallthru
          _
        // Predicated region
        $region93: #{tpu_custom_call.1} parent=87 // pred_check
          %p1225 = pneg %p369
        $region94: #{tpu_custom_call.1} parent=87 // pred_check_branch
          %1227 = sbr.rel (%p1225) target = $region96
        $region95: #{tpu_custom_call.1} parent=87 // pred_region
          %s1228 = sand.u32 %s354, 1
          %s1229 = scalar_lea.sflag [#allocation9], %s1228
          %s1230 = sand.u32 %s354, 1
          %s1231 = smul.addr %s1230, 32
          %s1232 = scalar_lea.vmem [#allocation8], %s1231
          %1234 = dma.done %s1229, 512
        $region96: #{tpu_custom_call.1} parent=87 // pred_fallthru
          _
      $region88: #{tpu_custom_call.1} parent=5 // pred_fallthru
        _
    $region6: #{tpu_custom_call.1} parent=1 // loop_footer
      %s33 = sadd.s32 1, %s29
    $region7: #{tpu_custom_call.1} parent=1 // loop_footer_branch
      %28 = sbr.rel target = $region3
    $region8: #{tpu_custom_call.1} parent=1 // loop_exit
      _
    %1235 = vsyncpa [#allocation5], 1
    %s1236 = scalar_lea.sflag [#allocation5], 1
    %1237 = vsyncpa %s1236, 1
    %1238 = vsyncpa [#allocation6], 1
    %s1239 = scalar_lea.sflag [#allocation6], 1
    %1240 = vsyncpa %s1239, 1
    %1241 = vsyncpa [#allocation9], 1
    %s1242 = scalar_lea.sflag [#allocation9], 1
    %1243 = vsyncpa %s1242, 1

</llo_original>
